<compile_context>
chip_gen: v5e
topology: v5e:2x2
jax: 0.10.0
libtpu: 0.0.40
codegen_flags: <defaults>
</compile_context>

<pallas_src>
import math

import jax
import jax.numpy as jnp
from jax.experimental import pallas as pl
from jax.experimental.pallas import tpu as pltpu

# ----------------------------- model config (synthetic, small) ---------------
VOCAB = 100
MAX_POS = 64
B, S = 2, 8          # batch, sequence
H = 32               # hidden dim
NH = 4               # attention heads
HD = H // NH         # head dim
FFN = 64             # intermediate dim
N_LAYERS = 2
LN_EPS = 1e-12       # DistilBERT LayerNorm eps

BS = B * S                        # rows of the folded activation block
SMALL_ROWS, SMALL_COLS = 8, 128   # packed per-layer bias/LN param block


# ----------------------------- in-kernel math helpers -------------------------
def _gelu_tanh(x):
    # TODO(synk): HF DistilBERT 'gelu' is exact-erf; the tanh approximation
    # (<~1e-3 abs diff) is used so the transcendental routes to the EUP slot
    # instead of a 10+ VPU-op erf polynomial over the (B*S, FFN) tile.
    c = math.sqrt(2.0 / math.pi)
    return 0.5 * x * (1.0 + jnp.tanh(c * (x + 0.044715 * x * x * x)))


def _layernorm(x, g, b, eps=LN_EPS):
    mu = jnp.mean(x, axis=-1, keepdims=True)
    xc = x - mu
    var = jnp.mean(xc * xc, axis=-1, keepdims=True)
    return xc * jax.lax.rsqrt(var + eps) * g + b


# ----------------------------- fused whole-network kernel ---------------------
def _distilbert_kernel(
    emb_ref,      # (BS, H)  f32   word+pos embedding sum, all batch elements
    maskb_ref,    # (B, S)   f32   additive attention-mask bias (0 / finfo.min)
    embln_ref,    # (2, H)   f32   embedding LayerNorm gamma/beta
    wqkv_ref,     # (H, 3H)  bf16  packed Q|K|V weight, this layer (Wq pre-scaled)
    wo_ref,       # (H, H)   bf16  attention output projection weight
    w1_ref,       # (H, FFN) bf16  FFN lin1 weight
    w2_ref,       # (FFN, H) bf16  FFN lin2 weight
    small_ref,    # (8, 128) f32   packed biases + LayerNorm params, this layer
    emb_out_ref,  # (BS, H)  f32   embedding-LN output (hidden_states[0])
    hs_ref,       # (BS, H)  f32   this layer's output hidden state
    attn_ref,     # (B*NH*S, S) f32  this layer's attention probabilities
    x_scratch,    # VMEM (BS, H) f32  running activation carried across layers
):
    layer = pl.program_id(0)

    # --- layer-0 prologue: embedding LayerNorm, init the carried activation --
    @pl.when(layer == 0)
    def _():
        x0 = _layernorm(emb_ref[...], embln_ref[0:1, :], embln_ref[1:2, :])
        x_scratch[...] = x0
        emb_out_ref[...] = x0

    x = x_scratch[...]                                   # (BS, H) f32
    mb = maskb_ref[...]                                  # (B, S)  additive bias

    sp = small_ref[...]                                  # (8, 128)
    b_qkv = sp[0:1, :3 * H]
    bo    = sp[1:2, :H]
    ln1_g = sp[2:3, :H]
    ln1_b = sp[3:4, :H]
    b1    = sp[4:5, :FFN]
    b2    = sp[5:6, :H]
    ln2_g = sp[6:7, :H]
    ln2_b = sp[7:8, :H]

    # --- multi-head self attention -------------------------------------------
    # Single fused QKV projection for all heads & batch rows (bf16 MXU, f32 acc).
    qkv = jnp.dot(x.astype(jnp.bfloat16), wqkv_ref[...],
                  preferred_element_type=jnp.float32) + b_qkv      # (BS, 3H) f32

    # Per-(batch, head) score tiles stacked along sublanes -> one 2-D tile.
    # 1/sqrt(HD) is already folded into Wq / bq; the mask is a plain add.
    score_tiles = []
    for b in range(B):
        qkv_b = qkv[b * S:(b + 1) * S, :]                # (S, 3H)
        mb_b = mb[b:b + 1, :]                            # (1, S)
        for h in range(NH):
            q_h = qkv_b[:, h * HD:(h + 1) * HD]          # (S, HD)
            k_h = qkv_b[:, H + h * HD:H + (h + 1) * HD]  # (S, HD)
            s_bh = jax.lax.dot_general(
                q_h, k_h, (((1,), (1,)), ((), ())),
                preferred_element_type=jnp.float32)      # (S, S)
            score_tiles.append(s_bh + mb_b)
    scores = jnp.concatenate(score_tiles, axis=0)        # (B*NH*S, S)

    # Softmax once over the 2-D tile (per-row lane reductions).
    m = jnp.max(scores, axis=-1, keepdims=True)
    e = jnp.exp(scores - m)
    # Exact divide: attention probs are an API output of the module.
    probs = e / jnp.sum(e, axis=-1, keepdims=True)       # (B*NH*S, S)
    attn_ref[...] = probs                                # single 2-D store

    # Context: lane-pack every head's (S, HD) context into one (BS, H) buffer,
    # then a single (BS,H)@(H,H) output projection (contraction depth H).
    ctx_rows = []
    for b in range(B):
        v_b = qkv[b * S:(b + 1) * S, 2 * H:3 * H]        # (S, H)
        ctx_b = jnp.concatenate(
            [jnp.dot(probs[(b * NH + h) * S:(b * NH + h + 1) * S, :],
                     v_b[:, h * HD:(h + 1) * HD],
                     preferred_element_type=jnp.float32)
             for h in range(NH)], axis=1)                # (S, H)
        ctx_rows.append(ctx_b)
    ctx = jnp.concatenate(ctx_rows, axis=0)              # (BS, H)

    attn_out = jnp.dot(ctx.astype(jnp.bfloat16), wo_ref[...],
                       preferred_element_type=jnp.float32) + bo

    # post-LN residual (DistilBERT sa_layer_norm)
    x1 = _layernorm(attn_out + x, ln1_g, ln1_b)

    # --- FFN -------------------------------------------------------------------
    h1 = _gelu_tanh(jnp.dot(x1.astype(jnp.bfloat16), w1_ref[...],
                            preferred_element_type=jnp.float32) + b1)
    h2 = jnp.dot(h1.astype(jnp.bfloat16), w2_ref[...],
                 preferred_element_type=jnp.float32) + b2

    # post-LN residual (DistilBERT output_layer_norm)
    x2 = _layernorm(h2 + x1, ln2_g, ln2_b)

    x_scratch[...] = x2
    hs_ref[...] = x2


# ----------------------------- full forward (DistilBertWrap.forward) ----------
def distil_bert_wrap_forward(params, input_ids, attention_mask):
    # Embeddings: word + position (data-dependent gathers stay in plain JAX).
    word_emb = params['word_embeddings'][input_ids]             # (B, S, H)
    pos_emb = params['position_embeddings'][jnp.arange(S)]      # (S, H)
    emb = (word_emb + pos_emb[None, :, :]).astype(jnp.float32).reshape(BS, H)
    # Additive mask bias (0 keep / finfo.min masked); reused by every layer.
    mask_bias = jnp.where(attention_mask == 0.0,
                          jnp.finfo(jnp.float32).min, 0.0).astype(jnp.float32)  # (B, S)

    out_shapes = (
        jax.ShapeDtypeStruct((BS, H), jnp.float32),                  # embedding-LN out
        jax.ShapeDtypeStruct((N_LAYERS, BS, H), jnp.float32),        # per-layer hidden
        jax.ShapeDtypeStruct((N_LAYERS, B * NH * S, S), jnp.float32),  # attention probs
    )
    in_specs = [
        pl.BlockSpec((BS, H),                        lambda l: (0, 0)),      # emb sum
        pl.BlockSpec((B, S),                         lambda l: (0, 0)),      # mask bias
        pl.BlockSpec((2, H),                         lambda l: (0, 0)),      # emb LN
        pl.BlockSpec((None, H, 3 * H),               lambda l: (l, 0, 0)),   # Wqkv
        pl.BlockSpec((None, H, H),                   lambda l: (l, 0, 0)),   # Wo
        pl.BlockSpec((None, H, FFN),                 lambda l: (l, 0, 0)),   # W1
        pl.BlockSpec((None, FFN, H),                 lambda l: (l, 0, 0)),   # W2
        pl.BlockSpec((None, SMALL_ROWS, SMALL_COLS), lambda l: (l, 0, 0)),   # biases/LN
    ]
    out_specs = (
        pl.BlockSpec((BS, H),                lambda l: (0, 0)),
        pl.BlockSpec((None, BS, H),          lambda l: (l, 0, 0)),
        pl.BlockSpec((None, B * NH * S, S),  lambda l: (l, 0, 0)),
    )

    emb_out, layer_hs, attn = pl.pallas_call(
        _distilbert_kernel,
        out_shape=out_shapes,
        grid=(N_LAYERS,),
        in_specs=in_specs,
        out_specs=out_specs,
        scratch_shapes=[pltpu.VMEM((BS, H), jnp.float32)],
        compiler_params=pltpu.CompilerParams(
            # Single sequential layer axis: activation carried in VMEM scratch,
            # per-layer weight DMA pipelined behind the previous layer's compute.
            dimension_semantics=("arbitrary",)),
    )(emb, mask_bias, params['emb_ln'], params['wqkv'], params['wo'],
      params['w1'], params['w2'], params['small'])

    emb_out = emb_out.reshape(B, S, H)
    layer_hs = layer_hs.reshape(N_LAYERS, B, S, H)
    attn = attn.reshape(N_LAYERS, B, NH, S, S)

    all_hidden_states = (emb_out,) + tuple(layer_hs[i] for i in range(N_LAYERS))
    all_self_attentions = tuple(attn[i] for i in range(N_LAYERS))
    sequence_output = layer_hs[N_LAYERS - 1]   # nn.Dropout(p=0.0) is identity
    return sequence_output, all_hidden_states, all_self_attentions


# ----------------------------- deterministic parameter init -------------------
def init_raw_params(key):
    def nrm(k, shape, scale=0.02):
        return scale * jax.random.normal(k, shape, dtype=jnp.float32)

    keys = jax.random.split(key, 2 + N_LAYERS)
    raw = {
        'word_embeddings': nrm(keys[0], (VOCAB, H)),
        'position_embeddings': nrm(keys[1], (MAX_POS, H)),
        'emb_ln_gamma': jnp.ones((H,), jnp.float32),
        'emb_ln_beta': jnp.zeros((H,), jnp.float32),
        'layers': [],
    }
    for li in range(N_LAYERS):
        lk = jax.random.split(keys[2 + li], 12)
        raw['layers'].append(dict(
            wq=nrm(lk[0], (H, H)),   bq=nrm(lk[1], (H,)),
            wk=nrm(lk[2], (H, H)),   bk=nrm(lk[3], (H,)),
            wv=nrm(lk[4], (H, H)),   bv=nrm(lk[5], (H,)),
            wo=nrm(lk[6], (H, H)),   bo=nrm(lk[7], (H,)),
            ln1_g=jnp.ones((H,), jnp.float32), ln1_b=jnp.zeros((H,), jnp.float32),
            w1=nrm(lk[8], (H, FFN)), b1=nrm(lk[9], (FFN,)),
            w2=nrm(lk[10], (FFN, H)), b2=nrm(lk[11], (H,)),
            ln2_g=jnp.ones((H,), jnp.float32), ln2_b=jnp.zeros((H,), jnp.float32),
        ))
    return raw


def pack_params(raw):
    """Parameter-prep-time packing: fold 1/sqrt(HD) into Wq/bq, pack Q|K|V,
    cast matmul weights to bf16, pack small per-layer params into (8,128)."""
    inv_sqrt_d = 1.0 / math.sqrt(HD)
    wqkv, wo, w1, w2, small = [], [], [], [], []
    for lp in raw['layers']:
        wq = lp['wq'] * inv_sqrt_d           # fold the score scale into Wq
        bq = lp['bq'] * inv_sqrt_d           # ... and into the Q bias
        wqkv.append(jnp.concatenate([wq, lp['wk'], lp['wv']], axis=1))  # (H, 3H)
        wo.append(lp['wo'])
        w1.append(lp['w1'])
        w2.append(lp['w2'])
        sm = jnp.zeros((SMALL_ROWS, SMALL_COLS), jnp.float32)
        sm = sm.at[0, :3 * H].set(jnp.concatenate([bq, lp['bk'], lp['bv']]))
        sm = sm.at[1, :H].set(lp['bo'])
        sm = sm.at[2, :H].set(lp['ln1_g'])
        sm = sm.at[3, :H].set(lp['ln1_b'])
        sm = sm.at[4, :FFN].set(lp['b1'])
        sm = sm.at[5, :H].set(lp['b2'])
        sm = sm.at[6, :H].set(lp['ln2_g'])
        sm = sm.at[7, :H].set(lp['ln2_b'])
        small.append(sm)
    return {
        'word_embeddings': raw['word_embeddings'],
        'position_embeddings': raw['position_embeddings'],
        'emb_ln': jnp.stack([raw['emb_ln_gamma'], raw['emb_ln_beta']], axis=0),
        # bf16 weights: halves HBM weight traffic and uses the bf16 MXU path
        # (f32 accumulation kept via preferred_element_type in the kernel).
        'wqkv': jnp.stack(wqkv).astype(jnp.bfloat16),
        'wo':   jnp.stack(wo).astype(jnp.bfloat16),
        'w1':   jnp.stack(w1).astype(jnp.bfloat16),
        'w2':   jnp.stack(w2).astype(jnp.bfloat16),
        'small': jnp.stack(small),
    }


# ----------------------------- main --------------------------------------------
if __name__ == "__main__":
    key = jax.random.PRNGKey(0)
    pkey, ikey = jax.random.split(key)
    params = pack_params(init_raw_params(pkey))

    input_ids = jax.random.randint(ikey, (B, S), 0, VOCAB, dtype=jnp.int32)
    attention_mask = jnp.array(
        [[1, 1, 1, 1, 1, 1, 1, 1],
         [1, 1, 1, 1, 1, 1, 0, 0]], dtype=jnp.float32)

    fwd = jax.jit(distil_bert_wrap_forward)
    seq_out, hidden_states, attentions = fwd(params, input_ids, attention_mask)

    jax.block_until_ready(seq_out)
    jax.block_until_ready(hidden_states)
    jax.block_until_ready(attentions)

    assert seq_out.shape == (B, S, H)
    assert len(hidden_states) == N_LAYERS + 1
    assert hidden_states[0].shape == (B, S, H)
    assert len(attentions) == N_LAYERS
    assert attentions[0].shape == (B, NH, S, S)
    print("KERNEL_OK")
</pallas_src>

<mosaic_0001>
module attributes {stable_mosaic.version = 11 : i64} {
  func.func @_distilbert_kernel(%arg0: i32, %arg1: memref<16x32xf32, #tpu.memory_space<vmem>>, %arg2: memref<2x8xf32, #tpu.memory_space<vmem>>, %arg3: memref<2x32xf32, #tpu.memory_space<vmem>>, %arg4: memref<1x32x96xbf16, #tpu.memory_space<vmem>>, %arg5: memref<1x32x32xbf16, #tpu.memory_space<vmem>>, %arg6: memref<1x32x64xbf16, #tpu.memory_space<vmem>>, %arg7: memref<1x64x32xbf16, #tpu.memory_space<vmem>>, %arg8: memref<1x8x128xf32, #tpu.memory_space<vmem>>, %arg9: memref<16x32xf32, #tpu.memory_space<vmem>>, %arg10: memref<1x16x32xf32, #tpu.memory_space<vmem>>, %arg11: memref<1x64x8xf32, #tpu.memory_space<vmem>>, %arg12: memref<16x32xf32, #tpu.memory_space<vmem>>) attributes {dimension_semantics = [#tpu.dimension_semantics<arbitrary>], iteration_bounds = array<i64: 2>, scalar_prefetch = 0 : i64, scratch_operands = 1 : i64, tpu.core_type = #tpu.core_type<tc>, window_params = [{pipeline_mode = #tpu.pipeline_mode<synchronous>, transform_indices = @transform_0, window_bounds = array<i64: 16, 32>}, {pipeline_mode = #tpu.pipeline_mode<synchronous>, transform_indices = @transform_1, window_bounds = array<i64: 2, 8>}, {pipeline_mode = #tpu.pipeline_mode<synchronous>, transform_indices = @transform_2, window_bounds = array<i64: 2, 32>}, {transform_indices = @transform_3, window_bounds = array<i64: 1, 32, 96>}, {transform_indices = @transform_4, window_bounds = array<i64: 1, 32, 32>}, {transform_indices = @transform_5, window_bounds = array<i64: 1, 32, 64>}, {transform_indices = @transform_6, window_bounds = array<i64: 1, 64, 32>}, {transform_indices = @transform_7, window_bounds = array<i64: 1, 8, 128>}, {pipeline_mode = #tpu.pipeline_mode<synchronous>, transform_indices = @transform_8, window_bounds = array<i64: 16, 32>}, {transform_indices = @transform_9, window_bounds = array<i64: 1, 16, 32>}, {transform_indices = @transform_10, window_bounds = array<i64: 1, 64, 8>}]} {
    %c0_i32 = arith.constant 0 : i32
    %0 = arith.cmpi eq, %arg0, %c0_i32 : i32
    %1 = arith.extui %0 : i1 to i32
    %c0_i32_0 = arith.constant 0 : i32
    %2 = arith.cmpi ne, %1, %c0_i32_0 : i32
    scf.if %2 {
      %c0_62 = arith.constant 0 : index
      %c0_63 = arith.constant 0 : index
      %184 = vector.load %arg1[%c0_62, %c0_63] : memref<16x32xf32, #tpu.memory_space<vmem>>, vector<16x32xf32>
      %c0_64 = arith.constant 0 : index
      %c0_65 = arith.constant 0 : index
      %185 = vector.load %arg3[%c0_64, %c0_65] : memref<2x32xf32, #tpu.memory_space<vmem>>, vector<1x32xf32>
      %c1 = arith.constant 1 : index
      %c0_66 = arith.constant 0 : index
      %186 = vector.load %arg3[%c1, %c0_66] : memref<2x32xf32, #tpu.memory_space<vmem>>, vector<1x32xf32>
      %cst_67 = arith.constant dense<0.000000e+00> : vector<16xf32>
      %187 = vector.multi_reduction <add>, %184, %cst_67 [1] : vector<16x32xf32> to vector<16xf32>
      %188 = vector.shape_cast %187 : vector<16xf32> to vector<16x1xf32>
      %cst_68 = arith.constant 3.200000e+01 : f32
      %189 = vector.broadcast %cst_68 : f32 to vector<16x1xf32>
      %190 = arith.divf %188, %189 : vector<16x1xf32>
      %191 = vector.broadcast %190 : vector<16x1xf32> to vector<16x32xf32>
      %192 = arith.subf %184, %191 : vector<16x32xf32>
      %193 = arith.mulf %192, %192 : vector<16x32xf32>
      %cst_69 = arith.constant dense<0.000000e+00> : vector<16xf32>
      %194 = vector.multi_reduction <add>, %193, %cst_69 [1] : vector<16x32xf32> to vector<16xf32>
      %195 = vector.shape_cast %194 : vector<16xf32> to vector<16x1xf32>
      %cst_70 = arith.constant 3.200000e+01 : f32
      %196 = vector.broadcast %cst_70 : f32 to vector<16x1xf32>
      %197 = arith.divf %195, %196 : vector<16x1xf32>
      %cst_71 = arith.constant 9.99999996E-13 : f32
      %198 = vector.broadcast %cst_71 : f32 to vector<16x1xf32>
      %199 = arith.addf %197, %198 : vector<16x1xf32>
      %200 = math.rsqrt %199 : vector<16x1xf32>
      %201 = vector.broadcast %200 : vector<16x1xf32> to vector<16x32xf32>
      %202 = arith.mulf %192, %201 : vector<16x32xf32>
      %203 = vector.broadcast %185 : vector<1x32xf32> to vector<16x32xf32>
      %204 = arith.mulf %202, %203 : vector<16x32xf32>
      %205 = vector.broadcast %186 : vector<1x32xf32> to vector<16x32xf32>
      %206 = arith.addf %204, %205 : vector<16x32xf32>
      %c0_72 = arith.constant 0 : index
      %c0_73 = arith.constant 0 : index
      %207 = vector.load %arg12[%c0_72, %c0_73] : memref<16x32xf32, #tpu.memory_space<vmem>>, vector<16x32xf32>
      tpu.vector_store %arg12[%c0_72, %c0_73], %206 {strides = array<i32>} : memref<16x32xf32, #tpu.memory_space<vmem>>, vector<16x32xf32>,
      %c0_74 = arith.constant 0 : index
      %c0_75 = arith.constant 0 : index
      %208 = vector.load %arg9[%c0_74, %c0_75] : memref<16x32xf32, #tpu.memory_space<vmem>>, vector<16x32xf32>
      tpu.vector_store %arg9[%c0_74, %c0_75], %206 {strides = array<i32>} : memref<16x32xf32, #tpu.memory_space<vmem>>, vector<16x32xf32>,
    } else {
    }
    %c0 = arith.constant 0 : index
    %c0_1 = arith.constant 0 : index
    %3 = vector.load %arg12[%c0, %c0_1] : memref<16x32xf32, #tpu.memory_space<vmem>>, vector<16x32xf32>
    %c0_2 = arith.constant 0 : index
    %c0_3 = arith.constant 0 : index
    %4 = vector.load %arg2[%c0_2, %c0_3] : memref<2x8xf32, #tpu.memory_space<vmem>>, vector<2x8xf32>
    %c0_4 = arith.constant 0 : index
    %c0_5 = arith.constant 0 : index
    %c0_6 = arith.constant 0 : index
    %5 = vector.load %arg8[%c0_4, %c0_5, %c0_6] : memref<1x8x128xf32, #tpu.memory_space<vmem>>, vector<1x8x128xf32>
    %6 = vector.shape_cast %5 : vector<1x8x128xf32> to vector<8x128xf32>
    %7 = vector.extract_strided_slice %6 {offsets = [0, 0], sizes = [1, 96], strides = [1, 1]} : vector<8x128xf32> to vector<1x96xf32>
    %8 = vector.extract_strided_slice %6 {offsets = [1, 0], sizes = [1, 32], strides = [1, 1]} : vector<8x128xf32> to vector<1x32xf32>
    %9 = vector.extract_strided_slice %6 {offsets = [2, 0], sizes = [1, 32], strides = [1, 1]} : vector<8x128xf32> to vector<1x32xf32>
    %10 = vector.extract_strided_slice %6 {offsets = [3, 0], sizes = [1, 32], strides = [1, 1]} : vector<8x128xf32> to vector<1x32xf32>
    %11 = vector.extract_strided_slice %6 {offsets = [4, 0], sizes = [1, 64], strides = [1, 1]} : vector<8x128xf32> to vector<1x64xf32>
    %12 = vector.extract_strided_slice %6 {offsets = [5, 0], sizes = [1, 32], strides = [1, 1]} : vector<8x128xf32> to vector<1x32xf32>
    %13 = vector.extract_strided_slice %6 {offsets = [6, 0], sizes = [1, 32], strides = [1, 1]} : vector<8x128xf32> to vector<1x32xf32>
    %14 = vector.extract_strided_slice %6 {offsets = [7, 0], sizes = [1, 32], strides = [1, 1]} : vector<8x128xf32> to vector<1x32xf32>
    %15 = arith.truncf %3 : vector<16x32xf32> to vector<16x32xbf16>
    %c0_7 = arith.constant 0 : index
    %c0_8 = arith.constant 0 : index
    %c0_9 = arith.constant 0 : index
    %16 = vector.load %arg4[%c0_7, %c0_8, %c0_9] : memref<1x32x96xbf16, #tpu.memory_space<vmem>>, vector<1x32x96xbf16>
    %17 = vector.shape_cast %16 : vector<1x32x96xbf16> to vector<32x96xbf16>
    %cst = arith.constant dense<0.000000e+00> : vector<16x96xf32>
    %18 = tpu.matmul %15, %17, %cst {dimension_numbers = #tpu.dot_dimension_numbers<[1], [0], [0], [1], [0, 0, 1, 1], [], []>} : vector<16x32xbf16>, vector<32x96xbf16>, vector<16x96xf32> -> vector<16x96xf32>
    %19 = vector.broadcast %7 : vector<1x96xf32> to vector<16x96xf32>
    %20 = arith.addf %18, %19 : vector<16x96xf32>
    %21 = vector.extract_strided_slice %20 {offsets = [0, 0], sizes = [8, 96], strides = [1, 1]} : vector<16x96xf32> to vector<8x96xf32>
    %22 = vector.extract_strided_slice %4 {offsets = [0, 0], sizes = [1, 8], strides = [1, 1]} : vector<2x8xf32> to vector<1x8xf32>
    %23 = vector.extract_strided_slice %21 {offsets = [0, 0], sizes = [8, 8], strides = [1, 1]} : vector<8x96xf32> to vector<8x8xf32>
    %24 = vector.extract_strided_slice %21 {offsets = [0, 32], sizes = [8, 8], strides = [1, 1]} : vector<8x96xf32> to vector<8x8xf32>
    %cst_10 = arith.constant dense<0.000000e+00> : vector<8x8xf32>
    %25 = tpu.matmul %23, %24, %cst_10 {dimension_numbers = #tpu.dot_dimension_numbers<[1], [1], [0], [0], [0, 0, 1, 0], [], []>} : vector<8x8xf32>, vector<8x8xf32>, vector<8x8xf32> -> vector<8x8xf32>
    %26 = vector.broadcast %22 : vector<1x8xf32> to vector<8x8xf32>
    %27 = arith.addf %25, %26 : vector<8x8xf32>
    %28 = vector.extract_strided_slice %21 {offsets = [0, 8], sizes = [8, 8], strides = [1, 1]} : vector<8x96xf32> to vector<8x8xf32>
    %29 = vector.extract_strided_slice %21 {offsets = [0, 40], sizes = [8, 8], strides = [1, 1]} : vector<8x96xf32> to vector<8x8xf32>
    %cst_11 = arith.constant dense<0.000000e+00> : vector<8x8xf32>
    %30 = tpu.matmul %28, %29, %cst_11 {dimension_numbers = #tpu.dot_dimension_numbers<[1], [1], [0], [0], [0, 0, 1, 0], [], []>} : vector<8x8xf32>, vector<8x8xf32>, vector<8x8xf32> -> vector<8x8xf32>
    %31 = vector.broadcast %22 : vector<1x8xf32> to vector<8x8xf32>
    %32 = arith.addf %30, %31 : vector<8x8xf32>
    %33 = vector.extract_strided_slice %21 {offsets = [0, 16], sizes = [8, 8], strides = [1, 1]} : vector<8x96xf32> to vector<8x8xf32>
    %34 = vector.extract_strided_slice %21 {offsets = [0, 48], sizes = [8, 8], strides = [1, 1]} : vector<8x96xf32> to vector<8x8xf32>
    %cst_12 = arith.constant dense<0.000000e+00> : vector<8x8xf32>
    %35 = tpu.matmul %33, %34, %cst_12 {dimension_numbers = #tpu.dot_dimension_numbers<[1], [1], [0], [0], [0, 0, 1, 0], [], []>} : vector<8x8xf32>, vector<8x8xf32>, vector<8x8xf32> -> vector<8x8xf32>
    %36 = vector.broadcast %22 : vector<1x8xf32> to vector<8x8xf32>
    %37 = arith.addf %35, %36 : vector<8x8xf32>
    %38 = vector.extract_strided_slice %21 {offsets = [0, 24], sizes = [8, 8], strides = [1, 1]} : vector<8x96xf32> to vector<8x8xf32>
    %39 = vector.extract_strided_slice %21 {offsets = [0, 56], sizes = [8, 8], strides = [1, 1]} : vector<8x96xf32> to vector<8x8xf32>
    %cst_13 = arith.constant dense<0.000000e+00> : vector<8x8xf32>
    %40 = tpu.matmul %38, %39, %cst_13 {dimension_numbers = #tpu.dot_dimension_numbers<[1], [1], [0], [0], [0, 0, 1, 0], [], []>} : vector<8x8xf32>, vector<8x8xf32>, vector<8x8xf32> -> vector<8x8xf32>
    %41 = vector.broadcast %22 : vector<1x8xf32> to vector<8x8xf32>
    %42 = arith.addf %40, %41 : vector<8x8xf32>
    %43 = vector.extract_strided_slice %20 {offsets = [8, 0], sizes = [8, 96], strides = [1, 1]} : vector<16x96xf32> to vector<8x96xf32>
    %44 = vector.extract_strided_slice %4 {offsets = [1, 0], sizes = [1, 8], strides = [1, 1]} : vector<2x8xf32> to vector<1x8xf32>
    %45 = vector.extract_strided_slice %43 {offsets = [0, 0], sizes = [8, 8], strides = [1, 1]} : vector<8x96xf32> to vector<8x8xf32>
    %46 = vector.extract_strided_slice %43 {offsets = [0, 32], sizes = [8, 8], strides = [1, 1]} : vector<8x96xf32> to vector<8x8xf32>
    %cst_14 = arith.constant dense<0.000000e+00> : vector<8x8xf32>
    %47 = tpu.matmul %45, %46, %cst_14 {dimension_numbers = #tpu.dot_dimension_numbers<[1], [1], [0], [0], [0, 0, 1, 0], [], []>} : vector<8x8xf32>, vector<8x8xf32>, vector<8x8xf32> -> vector<8x8xf32>
    %48 = vector.broadcast %44 : vector<1x8xf32> to vector<8x8xf32>
    %49 = arith.addf %47, %48 : vector<8x8xf32>
    %50 = vector.extract_strided_slice %43 {offsets = [0, 8], sizes = [8, 8], strides = [1, 1]} : vector<8x96xf32> to vector<8x8xf32>
    %51 = vector.extract_strided_slice %43 {offsets = [0, 40], sizes = [8, 8], strides = [1, 1]} : vector<8x96xf32> to vector<8x8xf32>
    %cst_15 = arith.constant dense<0.000000e+00> : vector<8x8xf32>
    %52 = tpu.matmul %50, %51, %cst_15 {dimension_numbers = #tpu.dot_dimension_numbers<[1], [1], [0], [0], [0, 0, 1, 0], [], []>} : vector<8x8xf32>, vector<8x8xf32>, vector<8x8xf32> -> vector<8x8xf32>
    %53 = vector.broadcast %44 : vector<1x8xf32> to vector<8x8xf32>
    %54 = arith.addf %52, %53 : vector<8x8xf32>
    %55 = vector.extract_strided_slice %43 {offsets = [0, 16], sizes = [8, 8], strides = [1, 1]} : vector<8x96xf32> to vector<8x8xf32>
    %56 = vector.extract_strided_slice %43 {offsets = [0, 48], sizes = [8, 8], strides = [1, 1]} : vector<8x96xf32> to vector<8x8xf32>
    %cst_16 = arith.constant dense<0.000000e+00> : vector<8x8xf32>
    %57 = tpu.matmul %55, %56, %cst_16 {dimension_numbers = #tpu.dot_dimension_numbers<[1], [1], [0], [0], [0, 0, 1, 0], [], []>} : vector<8x8xf32>, vector<8x8xf32>, vector<8x8xf32> -> vector<8x8xf32>
    %58 = vector.broadcast %44 : vector<1x8xf32> to vector<8x8xf32>
    %59 = arith.addf %57, %58 : vector<8x8xf32>
    %60 = vector.extract_strided_slice %43 {offsets = [0, 24], sizes = [8, 8], strides = [1, 1]} : vector<8x96xf32> to vector<8x8xf32>
    %61 = vector.extract_strided_slice %43 {offsets = [0, 56], sizes = [8, 8], strides = [1, 1]} : vector<8x96xf32> to vector<8x8xf32>
    %cst_17 = arith.constant dense<0.000000e+00> : vector<8x8xf32>
    %62 = tpu.matmul %60, %61, %cst_17 {dimension_numbers = #tpu.dot_dimension_numbers<[1], [1], [0], [0], [0, 0, 1, 0], [], []>} : vector<8x8xf32>, vector<8x8xf32>, vector<8x8xf32> -> vector<8x8xf32>
    %63 = vector.broadcast %44 : vector<1x8xf32> to vector<8x8xf32>
    %64 = arith.addf %62, %63 : vector<8x8xf32>
    %65 = tpu.concatenate %27, %32, %37, %42, %49, %54, %59, %64 in 0 : vector<8x8xf32>, vector<8x8xf32>, vector<8x8xf32>, vector<8x8xf32>, vector<8x8xf32>, vector<8x8xf32>, vector<8x8xf32>, vector<8x8xf32> -> vector<64x8xf32>
    %cst_18 = arith.constant dense<0xFF800000> : vector<64xf32>
    %66 = vector.multi_reduction <maximumf>, %65, %cst_18 [1] : vector<64x8xf32> to vector<64xf32>
    %67 = vector.shape_cast %66 : vector<64xf32> to vector<64x1xf32>
    %68 = vector.broadcast %67 : vector<64x1xf32> to vector<64x8xf32>
    %69 = arith.subf %65, %68 : vector<64x8xf32>
    %70 = math.exp %69 : vector<64x8xf32>
    %cst_19 = arith.constant dense<0.000000e+00> : vector<64xf32>
    %71 = vector.multi_reduction <add>, %70, %cst_19 [1] : vector<64x8xf32> to vector<64xf32>
    %72 = vector.shape_cast %71 : vector<64xf32> to vector<64x1xf32>
    %73 = vector.broadcast %72 : vector<64x1xf32> to vector<64x8xf32>
    %74 = arith.divf %70, %73 : vector<64x8xf32>
    %c0_20 = arith.constant 0 : index
    %c0_21 = arith.constant 0 : index
    %c0_22 = arith.constant 0 : index
    %75 = vector.load %arg11[%c0_20, %c0_21, %c0_22] : memref<1x64x8xf32, #tpu.memory_space<vmem>>, vector<1x64x8xf32>
    %76 = vector.shape_cast %75 : vector<1x64x8xf32> to vector<64x8xf32>
    %77 = vector.shape_cast %74 : vector<64x8xf32> to vector<1x64x8xf32>
    tpu.vector_store %arg11[%c0_20, %c0_21, %c0_22], %77 {strides = array<i32>} : memref<1x64x8xf32, #tpu.memory_space<vmem>>, vector<1x64x8xf32>,
    %78 = vector.extract_strided_slice %20 {offsets = [0, 64], sizes = [8, 32], strides = [1, 1]} : vector<16x96xf32> to vector<8x32xf32>
    %79 = vector.extract_strided_slice %74 {offsets = [0, 0], sizes = [8, 8], strides = [1, 1]} : vector<64x8xf32> to vector<8x8xf32>
    %80 = vector.extract_strided_slice %78 {offsets = [0, 0], sizes = [8, 8], strides = [1, 1]} : vector<8x32xf32> to vector<8x8xf32>
    %cst_23 = arith.constant dense<0.000000e+00> : vector<8x8xf32>
    %81 = tpu.matmul %79, %80, %cst_23 {dimension_numbers = #tpu.dot_dimension_numbers<[1], [0], [0], [1], [0, 0, 1, 1], [], []>} : vector<8x8xf32>, vector<8x8xf32>, vector<8x8xf32> -> vector<8x8xf32>
    %82 = vector.extract_strided_slice %74 {offsets = [8, 0], sizes = [8, 8], strides = [1, 1]} : vector<64x8xf32> to vector<8x8xf32>
    %83 = vector.extract_strided_slice %78 {offsets = [0, 8], sizes = [8, 8], strides = [1, 1]} : vector<8x32xf32> to vector<8x8xf32>
    %cst_24 = arith.constant dense<0.000000e+00> : vector<8x8xf32>
    %84 = tpu.matmul %82, %83, %cst_24 {dimension_numbers = #tpu.dot_dimension_numbers<[1], [0], [0], [1], [0, 0, 1, 1], [], []>} : vector<8x8xf32>, vector<8x8xf32>, vector<8x8xf32> -> vector<8x8xf32>
    %85 = vector.extract_strided_slice %74 {offsets = [16, 0], sizes = [8, 8], strides = [1, 1]} : vector<64x8xf32> to vector<8x8xf32>
    %86 = vector.extract_strided_slice %78 {offsets = [0, 16], sizes = [8, 8], strides = [1, 1]} : vector<8x32xf32> to vector<8x8xf32>
    %cst_25 = arith.constant dense<0.000000e+00> : vector<8x8xf32>
    %87 = tpu.matmul %85, %86, %cst_25 {dimension_numbers = #tpu.dot_dimension_numbers<[1], [0], [0], [1], [0, 0, 1, 1], [], []>} : vector<8x8xf32>, vector<8x8xf32>, vector<8x8xf32> -> vector<8x8xf32>
    %88 = vector.extract_strided_slice %74 {offsets = [24, 0], sizes = [8, 8], strides = [1, 1]} : vector<64x8xf32> to vector<8x8xf32>
    %89 = vector.extract_strided_slice %78 {offsets = [0, 24], sizes = [8, 8], strides = [1, 1]} : vector<8x32xf32> to vector<8x8xf32>
    %cst_26 = arith.constant dense<0.000000e+00> : vector<8x8xf32>
    %90 = tpu.matmul %88, %89, %cst_26 {dimension_numbers = #tpu.dot_dimension_numbers<[1], [0], [0], [1], [0, 0, 1, 1], [], []>} : vector<8x8xf32>, vector<8x8xf32>, vector<8x8xf32> -> vector<8x8xf32>
    %91 = tpu.concatenate %81, %84, %87, %90 in 1 : vector<8x8xf32>, vector<8x8xf32>, vector<8x8xf32>, vector<8x8xf32> -> vector<8x32xf32>
    %92 = vector.extract_strided_slice %20 {offsets = [8, 64], sizes = [8, 32], strides = [1, 1]} : vector<16x96xf32> to vector<8x32xf32>
    %93 = vector.extract_strided_slice %74 {offsets = [32, 0], sizes = [8, 8], strides = [1, 1]} : vector<64x8xf32> to vector<8x8xf32>
    %94 = vector.extract_strided_slice %92 {offsets = [0, 0], sizes = [8, 8], strides = [1, 1]} : vector<8x32xf32> to vector<8x8xf32>
    %cst_27 = arith.constant dense<0.000000e+00> : vector<8x8xf32>
    %95 = tpu.matmul %93, %94, %cst_27 {dimension_numbers = #tpu.dot_dimension_numbers<[1], [0], [0], [1], [0, 0, 1, 1], [], []>} : vector<8x8xf32>, vector<8x8xf32>, vector<8x8xf32> -> vector<8x8xf32>
    %96 = vector.extract_strided_slice %74 {offsets = [40, 0], sizes = [8, 8], strides = [1, 1]} : vector<64x8xf32> to vector<8x8xf32>
    %97 = vector.extract_strided_slice %92 {offsets = [0, 8], sizes = [8, 8], strides = [1, 1]} : vector<8x32xf32> to vector<8x8xf32>
    %cst_28 = arith.constant dense<0.000000e+00> : vector<8x8xf32>
    %98 = tpu.matmul %96, %97, %cst_28 {dimension_numbers = #tpu.dot_dimension_numbers<[1], [0], [0], [1], [0, 0, 1, 1], [], []>} : vector<8x8xf32>, vector<8x8xf32>, vector<8x8xf32> -> vector<8x8xf32>
    %99 = vector.extract_strided_slice %74 {offsets = [48, 0], sizes = [8, 8], strides = [1, 1]} : vector<64x8xf32> to vector<8x8xf32>
    %100 = vector.extract_strided_slice %92 {offsets = [0, 16], sizes = [8, 8], strides = [1, 1]} : vector<8x32xf32> to vector<8x8xf32>
    %cst_29 = arith.constant dense<0.000000e+00> : vector<8x8xf32>
    %101 = tpu.matmul %99, %100, %cst_29 {dimension_numbers = #tpu.dot_dimension_numbers<[1], [0], [0], [1], [0, 0, 1, 1], [], []>} : vector<8x8xf32>, vector<8x8xf32>, vector<8x8xf32> -> vector<8x8xf32>
    %102 = vector.extract_strided_slice %74 {offsets = [56, 0], sizes = [8, 8], strides = [1, 1]} : vector<64x8xf32> to vector<8x8xf32>
    %103 = vector.extract_strided_slice %92 {offsets = [0, 24], sizes = [8, 8], strides = [1, 1]} : vector<8x32xf32> to vector<8x8xf32>
    %cst_30 = arith.constant dense<0.000000e+00> : vector<8x8xf32>
    %104 = tpu.matmul %102, %103, %cst_30 {dimension_numbers = #tpu.dot_dimension_numbers<[1], [0], [0], [1], [0, 0, 1, 1], [], []>} : vector<8x8xf32>, vector<8x8xf32>, vector<8x8xf32> -> vector<8x8xf32>
    %105 = tpu.concatenate %95, %98, %101, %104 in 1 : vector<8x8xf32>, vector<8x8xf32>, vector<8x8xf32>, vector<8x8xf32> -> vector<8x32xf32>
    %106 = tpu.concatenate %91, %105 in 0 : vector<8x32xf32>, vector<8x32xf32> -> vector<16x32xf32>
    %107 = arith.truncf %106 : vector<16x32xf32> to vector<16x32xbf16>
    %c0_31 = arith.constant 0 : index
    %c0_32 = arith.constant 0 : index
    %c0_33 = arith.constant 0 : index
    %108 = vector.load %arg5[%c0_31, %c0_32, %c0_33] : memref<1x32x32xbf16, #tpu.memory_space<vmem>>, vector<1x32x32xbf16>
    %109 = vector.shape_cast %108 : vector<1x32x32xbf16> to vector<32x32xbf16>
    %cst_34 = arith.constant dense<0.000000e+00> : vector<16x32xf32>
    %110 = tpu.matmul %107, %109, %cst_34 {dimension_numbers = #tpu.dot_dimension_numbers<[1], [0], [0], [1], [0, 0, 1, 1], [], []>} : vector<16x32xbf16>, vector<32x32xbf16>, vector<16x32xf32> -> vector<16x32xf32>
    %111 = vector.broadcast %8 : vector<1x32xf32> to vector<16x32xf32>
    %112 = arith.addf %110, %111 : vector<16x32xf32>
    %113 = arith.addf %112, %3 : vector<16x32xf32>
    %cst_35 = arith.constant dense<0.000000e+00> : vector<16xf32>
    %114 = vector.multi_reduction <add>, %113, %cst_35 [1] : vector<16x32xf32> to vector<16xf32>
    %115 = vector.shape_cast %114 : vector<16xf32> to vector<16x1xf32>
    %cst_36 = arith.constant 3.200000e+01 : f32
    %116 = vector.broadcast %cst_36 : f32 to vector<16x1xf32>
    %117 = arith.divf %115, %116 : vector<16x1xf32>
    %118 = vector.broadcast %117 : vector<16x1xf32> to vector<16x32xf32>
    %119 = arith.subf %113, %118 : vector<16x32xf32>
    %120 = arith.mulf %119, %119 : vector<16x32xf32>
    %cst_37 = arith.constant dense<0.000000e+00> : vector<16xf32>
    %121 = vector.multi_reduction <add>, %120, %cst_37 [1] : vector<16x32xf32> to vector<16xf32>
    %122 = vector.shape_cast %121 : vector<16xf32> to vector<16x1xf32>
    %cst_38 = arith.constant 3.200000e+01 : f32
    %123 = vector.broadcast %cst_38 : f32 to vector<16x1xf32>
    %124 = arith.divf %122, %123 : vector<16x1xf32>
    %cst_39 = arith.constant 9.99999996E-13 : f32
    %125 = vector.broadcast %cst_39 : f32 to vector<16x1xf32>
    %126 = arith.addf %124, %125 : vector<16x1xf32>
    %127 = math.rsqrt %126 : vector<16x1xf32>
    %128 = vector.broadcast %127 : vector<16x1xf32> to vector<16x32xf32>
    %129 = arith.mulf %119, %128 : vector<16x32xf32>
    %130 = vector.broadcast %9 : vector<1x32xf32> to vector<16x32xf32>
    %131 = arith.mulf %129, %130 : vector<16x32xf32>
    %132 = vector.broadcast %10 : vector<1x32xf32> to vector<16x32xf32>
    %133 = arith.addf %131, %132 : vector<16x32xf32>
    %134 = arith.truncf %133 : vector<16x32xf32> to vector<16x32xbf16>
    %c0_40 = arith.constant 0 : index
    %c0_41 = arith.constant 0 : index
    %c0_42 = arith.constant 0 : index
    %135 = vector.load %arg6[%c0_40, %c0_41, %c0_42] : memref<1x32x64xbf16, #tpu.memory_space<vmem>>, vector<1x32x64xbf16>
    %136 = vector.shape_cast %135 : vector<1x32x64xbf16> to vector<32x64xbf16>
    %cst_43 = arith.constant dense<0.000000e+00> : vector<16x64xf32>
    %137 = tpu.matmul %134, %136, %cst_43 {dimension_numbers = #tpu.dot_dimension_numbers<[1], [0], [0], [1], [0, 0, 1, 1], [], []>} : vector<16x32xbf16>, vector<32x64xbf16>, vector<16x64xf32> -> vector<16x64xf32>
    %138 = vector.broadcast %11 : vector<1x64xf32> to vector<16x64xf32>
    %139 = arith.addf %137, %138 : vector<16x64xf32>
    %cst_44 = arith.constant 5.000000e-01 : f32
    %140 = vector.broadcast %cst_44 : f32 to vector<16x64xf32>
    %141 = arith.mulf %140, %139 : vector<16x64xf32>
    %cst_45 = arith.constant 4.471500e-02 : f32
    %142 = vector.broadcast %cst_45 : f32 to vector<16x64xf32>
    %143 = arith.mulf %142, %139 : vector<16x64xf32>
    %144 = arith.mulf %143, %139 : vector<16x64xf32>
    %145 = arith.mulf %144, %139 : vector<16x64xf32>
    %146 = arith.addf %139, %145 : vector<16x64xf32>
    %cst_46 = arith.constant 0.797884583 : f32
    %147 = vector.broadcast %cst_46 : f32 to vector<16x64xf32>
    %148 = arith.mulf %147, %146 : vector<16x64xf32>
    %149 = math.tanh %148 : vector<16x64xf32>
    %cst_47 = arith.constant 1.000000e+00 : f32
    %150 = vector.broadcast %cst_47 : f32 to vector<16x64xf32>
    %151 = arith.addf %150, %149 : vector<16x64xf32>
    %152 = arith.mulf %141, %151 : vector<16x64xf32>
    %153 = arith.truncf %152 : vector<16x64xf32> to vector<16x64xbf16>
    %c0_48 = arith.constant 0 : index
    %c0_49 = arith.constant 0 : index
    %c0_50 = arith.constant 0 : index
    %154 = vector.load %arg7[%c0_48, %c0_49, %c0_50] : memref<1x64x32xbf16, #tpu.memory_space<vmem>>, vector<1x64x32xbf16>
    %155 = vector.shape_cast %154 : vector<1x64x32xbf16> to vector<64x32xbf16>
    %cst_51 = arith.constant dense<0.000000e+00> : vector<16x32xf32>
    %156 = tpu.matmul %153, %155, %cst_51 {dimension_numbers = #tpu.dot_dimension_numbers<[1], [0], [0], [1], [0, 0, 1, 1], [], []>} : vector<16x64xbf16>, vector<64x32xbf16>, vector<16x32xf32> -> vector<16x32xf32>
    %157 = vector.broadcast %12 : vector<1x32xf32> to vector<16x32xf32>
    %158 = arith.addf %156, %157 : vector<16x32xf32>
    %159 = arith.addf %158, %133 : vector<16x32xf32>
    %cst_52 = arith.constant dense<0.000000e+00> : vector<16xf32>
    %160 = vector.multi_reduction <add>, %159, %cst_52 [1] : vector<16x32xf32> to vector<16xf32>
    %161 = vector.shape_cast %160 : vector<16xf32> to vector<16x1xf32>
    %cst_53 = arith.constant 3.200000e+01 : f32
    %162 = vector.broadcast %cst_53 : f32 to vector<16x1xf32>
    %163 = arith.divf %161, %162 : vector<16x1xf32>
    %164 = vector.broadcast %163 : vector<16x1xf32> to vector<16x32xf32>
    %165 = arith.subf %159, %164 : vector<16x32xf32>
    %166 = arith.mulf %165, %165 : vector<16x32xf32>
    %cst_54 = arith.constant dense<0.000000e+00> : vector<16xf32>
    %167 = vector.multi_reduction <add>, %166, %cst_54 [1] : vector<16x32xf32> to vector<16xf32>
    %168 = vector.shape_cast %167 : vector<16xf32> to vector<16x1xf32>
    %cst_55 = arith.constant 3.200000e+01 : f32
    %169 = vector.broadcast %cst_55 : f32 to vector<16x1xf32>
    %170 = arith.divf %168, %169 : vector<16x1xf32>
    %cst_56 = arith.constant 9.99999996E-13 : f32
    %171 = vector.broadcast %cst_56 : f32 to vector<16x1xf32>
    %172 = arith.addf %170, %171 : vector<16x1xf32>
    %173 = math.rsqrt %172 : vector<16x1xf32>
    %174 = vector.broadcast %173 : vector<16x1xf32> to vector<16x32xf32>
    %175 = arith.mulf %165, %174 : vector<16x32xf32>
    %176 = vector.broadcast %13 : vector<1x32xf32> to vector<16x32xf32>
    %177 = arith.mulf %175, %176 : vector<16x32xf32>
    %178 = vector.broadcast %14 : vector<1x32xf32> to vector<16x32xf32>
    %179 = arith.addf %177, %178 : vector<16x32xf32>
    %c0_57 = arith.constant 0 : index
    %c0_58 = arith.constant 0 : index
    %180 = vector.load %arg12[%c0_57, %c0_58] : memref<16x32xf32, #tpu.memory_space<vmem>>, vector<16x32xf32>
    tpu.vector_store %arg12[%c0_57, %c0_58], %179 {strides = array<i32>} : memref<16x32xf32, #tpu.memory_space<vmem>>, vector<16x32xf32>,
    %c0_59 = arith.constant 0 : index
    %c0_60 = arith.constant 0 : index
    %c0_61 = arith.constant 0 : index
    %181 = vector.load %arg10[%c0_59, %c0_60, %c0_61] : memref<1x16x32xf32, #tpu.memory_space<vmem>>, vector<1x16x32xf32>
    %182 = vector.shape_cast %181 : vector<1x16x32xf32> to vector<16x32xf32>
    %183 = vector.shape_cast %179 : vector<16x32xf32> to vector<1x16x32xf32>
    tpu.vector_store %arg10[%c0_59, %c0_60, %c0_61], %183 {strides = array<i32>} : memref<1x16x32xf32, #tpu.memory_space<vmem>>, vector<1x16x32xf32>,
    return
  }
  func.func @transform_0(%arg0: i32) -> (i32, i32) {
    %c0_i32 = arith.constant 0 : i32
    %c0_i32_0 = arith.constant 0 : i32
    %c0_i32_1 = arith.constant 0 : i32
    return %c0_i32, %c0_i32_0 : i32, i32
  }
  func.func @transform_1(%arg0: i32) -> (i32, i32) {
    %c0_i32 = arith.constant 0 : i32
    %c0_i32_0 = arith.constant 0 : i32
    %c0_i32_1 = arith.constant 0 : i32
    return %c0_i32, %c0_i32_0 : i32, i32
  }
  func.func @transform_2(%arg0: i32) -> (i32, i32) {
    %c0_i32 = arith.constant 0 : i32
    %c0_i32_0 = arith.constant 0 : i32
    %c0_i32_1 = arith.constant 0 : i32
    return %c0_i32, %c0_i32_0 : i32, i32
  }
  func.func @transform_3(%arg0: i32) -> (i32, i32, i32) {
    %c0_i32 = arith.constant 0 : i32
    %c0_i32_0 = arith.constant 0 : i32
    %c0_i32_1 = arith.constant 0 : i32
    return %arg0, %c0_i32, %c0_i32_0 : i32, i32, i32
  }
  func.func @transform_4(%arg0: i32) -> (i32, i32, i32) {
    %c0_i32 = arith.constant 0 : i32
    %c0_i32_0 = arith.constant 0 : i32
    %c0_i32_1 = arith.constant 0 : i32
    return %arg0, %c0_i32, %c0_i32_0 : i32, i32, i32
  }
  func.func @transform_5(%arg0: i32) -> (i32, i32, i32) {
    %c0_i32 = arith.constant 0 : i32
    %c0_i32_0 = arith.constant 0 : i32
    %c0_i32_1 = arith.constant 0 : i32
    return %arg0, %c0_i32, %c0_i32_0 : i32, i32, i32
  }
  func.func @transform_6(%arg0: i32) -> (i32, i32, i32) {
    %c0_i32 = arith.constant 0 : i32
    %c0_i32_0 = arith.constant 0 : i32
    %c0_i32_1 = arith.constant 0 : i32
    return %arg0, %c0_i32, %c0_i32_0 : i32, i32, i32
  }
  func.func @transform_7(%arg0: i32) -> (i32, i32, i32) {
    %c0_i32 = arith.constant 0 : i32
    %c0_i32_0 = arith.constant 0 : i32
    %c0_i32_1 = arith.constant 0 : i32
    return %arg0, %c0_i32, %c0_i32_0 : i32, i32, i32
  }
  func.func @transform_8(%arg0: i32) -> (i32, i32) {
    %c0_i32 = arith.constant 0 : i32
    %c0_i32_0 = arith.constant 0 : i32
    %c0_i32_1 = arith.constant 0 : i32
    return %c0_i32, %c0_i32_0 : i32, i32
  }
  func.func @transform_9(%arg0: i32) -> (i32, i32, i32) {
    %c0_i32 = arith.constant 0 : i32
    %c0_i32_0 = arith.constant 0 : i32
    %c0_i32_1 = arith.constant 0 : i32
    return %arg0, %c0_i32, %c0_i32_0 : i32, i32, i32
  }
  func.func @transform_10(%arg0: i32) -> (i32, i32, i32) {
    %c0_i32 = arith.constant 0 : i32
    %c0_i32_0 = arith.constant 0 : i32
    %c0_i32_1 = arith.constant 0 : i32
    return %arg0, %c0_i32, %c0_i32_0 : i32, i32, i32
  }
}

</mosaic_0001>

<llo_original>
// kernel: distil_bert_wrap_forward.1
$region0: #{distil_bert_wrap_forward.1}
  #allocation0 [shape = 'u32[]', space=smem, size = 0x4, offset = 0x4, fixed_abs, tag = 'smem constant byte address 0x4 - core index']
  #allocation1 [shape = 'u32[72,128]{1,0:T(1,128)}', space=vmem, size = 0x9000, scoped, tag = 'internal scratch']
  #allocation2 [shape = 'f32[16,32]{1,0:T(8,128)}', space=vmem, size = 0x2000, scoped, tag = 'scratch operand']
  %s0 = inlined_call_operand.vmem [shape: f32[16,32], index: 0, kind: input, shape index: {}]
  %s1 = inlined_call_operand.vmem [shape: f32[2,8], index: 1, kind: input, shape index: {}]
  %s2 = inlined_call_operand.vmem [shape: f32[2,32], index: 2, kind: input, shape index: {}]
  %s3 = inlined_call_operand.vmem [shape: bf16[2,32,96], index: 3, kind: input, shape index: {}]
  %s4 = inlined_call_operand.vmem [shape: bf16[2,32,32], index: 4, kind: input, shape index: {}]
  %s5 = inlined_call_operand.vmem [shape: bf16[2,32,64], index: 5, kind: input, shape index: {}]
  %s6 = inlined_call_operand.vmem [shape: bf16[2,64,32], index: 6, kind: input, shape index: {}]
  %s7 = inlined_call_operand.vmem [shape: f32[2,8,128], index: 7, kind: input, shape index: {}]
  %s8 = inlined_call_operand.hbm [shape: f32[16,32], index: 8, kind: output, shape index: {0}]
  %s9 = inlined_call_operand.vmem [shape: f32[2,16,32], index: 9, kind: output, shape index: {1}]
  %s10 = inlined_call_operand.vmem [shape: f32[2,64,8], index: 10, kind: output, shape index: {2}]
  %11 = xla_tuple %s8, %s9, %s10
  %s12 = sld [smem:[#allocation0]]
  $region85: #{distil_bert_wrap_forward.1} parent=0
    _
  %s14 = ssub.s32 1, %s12
  %s15 = scalar_select 0, %s14, %s12
  $region1: #{distil_bert_wrap_forward.1} parent=0
    #allocation3 [shape = 'u8[8192]{0}', space=vmem, size = 0x2000, scoped, tag = 'output window, operand 0, single buffered']
    #allocation4 [shape = 's32[2]{0}', space=sflag, size = 0x8, scoped, tag = 'scoped memory for distil_bert_wrap_forward.1']
    %16 = vsyncpa [#allocation4], 0
    loop: start=0, step=1, limit=4
    $region2: #{distil_bert_wrap_forward.1} parent=1 // loop_pre_header
      _
    $region3: #{distil_bert_wrap_forward.1} parent=1 // loop_header
      %s18 = sphi 0, %s22
      %p19 = scmp.ge.s32.totalorder %s18, 4
      %s26 = sphi 0, %s26
      %s28 = sphi 0, %s26
      %s29 = sphi 0, %s28
      %s43 = sphi 0, %s29
      %s47 = sphi 0, %s47
      %s49 = sphi 0, %s47
      %s50 = sphi 0, %s49
      %s64 = sphi 0, %s50
      %s68 = sphi 0, %s68
      %s70 = sphi 0, %s68
      %s71 = sphi 0, %s70
      %s85 = sphi 0, %s71
      %s91 = sphi 0, %s93
      %s94 = sphi 0, %s91
      %s95 = sphi 0, %s94
      %s111 = sphi 0, %s95
      %s117 = sphi 0, %s119
      %s120 = sphi 0, %s117
      %s121 = sphi 0, %s120
      %s137 = sphi 0, %s121
      %s143 = sphi 0, %s145
      %s146 = sphi 0, %s143
      %s147 = sphi 0, %s146
      %s163 = sphi 0, %s147
      %s169 = sphi 0, %s171
      %s172 = sphi 0, %s169
      %s173 = sphi 0, %s172
      %s189 = sphi 0, %s173
      %s195 = sphi 0, %s197
      %s198 = sphi 0, %s195
      %s199 = sphi 0, %s198
      %s215 = sphi 0, %s199
      %s219 = sphi 0, %s219
      %s221 = sphi 0, %s219
      %s222 = sphi 0, %s221
      %s236 = sphi 0, %s222
      %s242 = sphi 0, %s244
      %s245 = sphi 0, %s242
      %s246 = sphi 0, %s245
      %s262 = sphi 0, %s246
      %s268 = sphi 0, %s270
      %s271 = sphi 0, %s268
      %s272 = sphi 0, %s271
      %s288 = sphi 0, %s272
    $region4: #{distil_bert_wrap_forward.1} parent=1 // loop_header_branch
      %21 = sbr.rel (%p19) target = $region8
    $region5: #{distil_bert_wrap_forward.1} parent=1 // loop_body
      %s23 = ssub.s32 %s18, 1
      %s24 = ssub.s32 %s18, 2
      %s25 = sadd.s32 %s18, 1
      %s27 = sadd.s32 %s26, 1
      %p30 = scmp.eq.s32.totalorder %s18, 1
      %p31 = scmp.ne.s32.totalorder %s26, %s28
      %p32 = scmp.eq.s32.totalorder %s18, 0
      %p33 = por %p31, %p32
      %p34 = scmp.ne.s32.totalorder %s26, %s28
      %p35 = scmp.eq.s32.totalorder %s23, 1
      %p36 = por %p34, %p35
      %p37 = scmp.ne.s32.totalorder %s28, %s29
      %p38 = scmp.eq.s32.totalorder %s23, 0
      %p39 = por %p37, %p38
      %p40 = scmp.ne.s32.totalorder %s28, %s29
      %p41 = scmp.eq.s32.totalorder %s24, 1
      %p42 = por %p40, %p41
      %p44 = scmp.ne.s32.totalorder %s29, %s43
      %p45 = scmp.eq.s32.totalorder %s24, 0
      %p46 = por %p44, %p45
      %s48 = sadd.s32 %s47, 1
      %p51 = scmp.eq.s32.totalorder %s18, 1
      %p52 = scmp.ne.s32.totalorder %s47, %s49
      %p53 = scmp.eq.s32.totalorder %s18, 0
      %p54 = por %p52, %p53
      %p55 = scmp.ne.s32.totalorder %s47, %s49
      %p56 = scmp.eq.s32.totalorder %s23, 1
      %p57 = por %p55, %p56
      %p58 = scmp.ne.s32.totalorder %s49, %s50
      %p59 = scmp.eq.s32.totalorder %s23, 0
      %p60 = por %p58, %p59
      %p61 = scmp.ne.s32.totalorder %s49, %s50
      %p62 = scmp.eq.s32.totalorder %s24, 1
      %p63 = por %p61, %p62
      %p65 = scmp.ne.s32.totalorder %s50, %s64
      %p66 = scmp.eq.s32.totalorder %s24, 0
      %p67 = por %p65, %p66
      %s69 = sadd.s32 %s68, 1
      %p72 = scmp.eq.s32.totalorder %s18, 1
      %p73 = scmp.ne.s32.totalorder %s68, %s70
      %p74 = scmp.eq.s32.totalorder %s18, 0
      %p75 = por %p73, %p74
      %p76 = scmp.ne.s32.totalorder %s68, %s70
      %p77 = scmp.eq.s32.totalorder %s23, 1
      %p78 = por %p76, %p77
      %p79 = scmp.ne.s32.totalorder %s70, %s71
      %p80 = scmp.eq.s32.totalorder %s23, 0
      %p81 = por %p79, %p80
      %p82 = scmp.ne.s32.totalorder %s70, %s71
      %p83 = scmp.eq.s32.totalorder %s24, 1
      %p84 = por %p82, %p83
      %p86 = scmp.ne.s32.totalorder %s71, %s85
      %p87 = scmp.eq.s32.totalorder %s24, 0
      %p88 = por %p86, %p87
      %s89 = ssub.s32 %s18, %s25
      %p90 = scmp.eq.s32.totalorder %s89, 0
      %s92 = sadd.s32 %s91, 1
      %s93 = scalar_select %p90, %s91, %s92
      %p96 = pneg %p90
      %p97 = scmp.eq.s32.totalorder %s18, 1
      %p98 = por %p96, %p97
      %p99 = scmp.ne.s32.totalorder %s91, %s94
      %p100 = scmp.eq.s32.totalorder %s18, 0
      %p101 = por %p99, %p100
      %p102 = scmp.ne.s32.totalorder %s91, %s94
      %p103 = scmp.eq.s32.totalorder %s23, 1
      %p104 = por %p102, %p103
      %p105 = scmp.ne.s32.totalorder %s94, %s95
      %p106 = scmp.eq.s32.totalorder %s23, 0
      %p107 = por %p105, %p106
      %p108 = scmp.ne.s32.totalorder %s94, %s95
      %p109 = scmp.eq.s32.totalorder %s24, 1
      %p110 = por %p108, %p109
      %p112 = scmp.ne.s32.totalorder %s95, %s111
      %p113 = scmp.eq.s32.totalorder %s24, 0
      %p114 = por %p112, %p113
      %s115 = ssub.s32 %s18, %s25
      %p116 = scmp.eq.s32.totalorder %s115, 0
      %s118 = sadd.s32 %s117, 1
      %s119 = scalar_select %p116, %s117, %s118
      %p122 = pneg %p116
      %p123 = scmp.eq.s32.totalorder %s18, 1
      %p124 = por %p122, %p123
      %p125 = scmp.ne.s32.totalorder %s117, %s120
      %p126 = scmp.eq.s32.totalorder %s18, 0
      %p127 = por %p125, %p126
      %p128 = scmp.ne.s32.totalorder %s117, %s120
      %p129 = scmp.eq.s32.totalorder %s23, 1
      %p130 = por %p128, %p129
      %p131 = scmp.ne.s32.totalorder %s120, %s121
      %p132 = scmp.eq.s32.totalorder %s23, 0
      %p133 = por %p131, %p132
      %p134 = scmp.ne.s32.totalorder %s120, %s121
      %p135 = scmp.eq.s32.totalorder %s24, 1
      %p136 = por %p134, %p135
      %p138 = scmp.ne.s32.totalorder %s121, %s137
      %p139 = scmp.eq.s32.totalorder %s24, 0
      %p140 = por %p138, %p139
      %s141 = ssub.s32 %s18, %s25
      %p142 = scmp.eq.s32.totalorder %s141, 0
      %s144 = sadd.s32 %s143, 1
      %s145 = scalar_select %p142, %s143, %s144
      %p148 = pneg %p142
      %p149 = scmp.eq.s32.totalorder %s18, 1
      %p150 = por %p148, %p149
      %p151 = scmp.ne.s32.totalorder %s143, %s146
      %p152 = scmp.eq.s32.totalorder %s18, 0
      %p153 = por %p151, %p152
      %p154 = scmp.ne.s32.totalorder %s143, %s146
      %p155 = scmp.eq.s32.totalorder %s23, 1
      %p156 = por %p154, %p155
      %p157 = scmp.ne.s32.totalorder %s146, %s147
      %p158 = scmp.eq.s32.totalorder %s23, 0
      %p159 = por %p157, %p158
      %p160 = scmp.ne.s32.totalorder %s146, %s147
      %p161 = scmp.eq.s32.totalorder %s24, 1
      %p162 = por %p160, %p161
      %p164 = scmp.ne.s32.totalorder %s147, %s163
      %p165 = scmp.eq.s32.totalorder %s24, 0
      %p166 = por %p164, %p165
      %s167 = ssub.s32 %s18, %s25
      %p168 = scmp.eq.s32.totalorder %s167, 0
      %s170 = sadd.s32 %s169, 1
      %s171 = scalar_select %p168, %s169, %s170
      %p174 = pneg %p168
      %p175 = scmp.eq.s32.totalorder %s18, 1
      %p176 = por %p174, %p175
      %p177 = scmp.ne.s32.totalorder %s169, %s172
      %p178 = scmp.eq.s32.totalorder %s18, 0
      %p179 = por %p177, %p178
      %p180 = scmp.ne.s32.totalorder %s169, %s172
      %p181 = scmp.eq.s32.totalorder %s23, 1
      %p182 = por %p180, %p181
      %p183 = scmp.ne.s32.totalorder %s172, %s173
      %p184 = scmp.eq.s32.totalorder %s23, 0
      %p185 = por %p183, %p184
      %p186 = scmp.ne.s32.totalorder %s172, %s173
      %p187 = scmp.eq.s32.totalorder %s24, 1
      %p188 = por %p186, %p187
      %p190 = scmp.ne.s32.totalorder %s173, %s189
      %p191 = scmp.eq.s32.totalorder %s24, 0
      %p192 = por %p190, %p191
      %s193 = ssub.s32 %s18, %s25
      %p194 = scmp.eq.s32.totalorder %s193, 0
      %s196 = sadd.s32 %s195, 1
      %s197 = scalar_select %p194, %s195, %s196
      %p200 = pneg %p194
      %p201 = scmp.eq.s32.totalorder %s18, 1
      %p202 = por %p200, %p201
      %p203 = scmp.ne.s32.totalorder %s195, %s198
      %p204 = scmp.eq.s32.totalorder %s18, 0
      %p205 = por %p203, %p204
      %p206 = scmp.ne.s32.totalorder %s195, %s198
      %p207 = scmp.eq.s32.totalorder %s23, 1
      %p208 = por %p206, %p207
      %p209 = scmp.ne.s32.totalorder %s198, %s199
      %p210 = scmp.eq.s32.totalorder %s23, 0
      %p211 = por %p209, %p210
      %p212 = scmp.ne.s32.totalorder %s198, %s199
      %p213 = scmp.eq.s32.totalorder %s24, 1
      %p214 = por %p212, %p213
      %p216 = scmp.ne.s32.totalorder %s199, %s215
      %p217 = scmp.eq.s32.totalorder %s24, 0
      %p218 = por %p216, %p217
      %s220 = sadd.s32 %s219, 1
      %p223 = scmp.eq.s32.totalorder %s18, 1
      %p224 = scmp.ne.s32.totalorder %s219, %s221
      %p225 = scmp.eq.s32.totalorder %s18, 0
      %p226 = por %p224, %p225
      %p227 = scmp.ne.s32.totalorder %s219, %s221
      %p228 = scmp.eq.s32.totalorder %s23, 1
      %p229 = por %p227, %p228
      %p230 = scmp.ne.s32.totalorder %s221, %s222
      %p231 = scmp.eq.s32.totalorder %s23, 0
      %p232 = por %p230, %p231
      %p233 = scmp.ne.s32.totalorder %s221, %s222
      %p234 = scmp.eq.s32.totalorder %s24, 1
      %p235 = por %p233, %p234
      %p237 = scmp.ne.s32.totalorder %s222, %s236
      %p238 = scmp.eq.s32.totalorder %s24, 0
      %p239 = por %p237, %p238
      %s240 = ssub.s32 %s18, %s25
      %p241 = scmp.eq.s32.totalorder %s240, 0
      %s243 = sadd.s32 %s242, 1
      %s244 = scalar_select %p241, %s242, %s243
      %p247 = pneg %p241
      %p248 = scmp.eq.s32.totalorder %s18, 1
      %p249 = por %p247, %p248
      %p250 = scmp.ne.s32.totalorder %s242, %s245
      %p251 = scmp.eq.s32.totalorder %s18, 0
      %p252 = por %p250, %p251
      %p253 = scmp.ne.s32.totalorder %s242, %s245
      %p254 = scmp.eq.s32.totalorder %s23, 1
      %p255 = por %p253, %p254
      %p256 = scmp.ne.s32.totalorder %s245, %s246
      %p257 = scmp.eq.s32.totalorder %s23, 0
      %p258 = por %p256, %p257
      %p259 = scmp.ne.s32.totalorder %s245, %s246
      %p260 = scmp.eq.s32.totalorder %s24, 1
      %p261 = por %p259, %p260
      %p263 = scmp.ne.s32.totalorder %s246, %s262
      %p264 = scmp.eq.s32.totalorder %s24, 0
      %p265 = por %p263, %p264
      %s266 = ssub.s32 %s18, %s25
      %p267 = scmp.eq.s32.totalorder %s266, 0
      %s269 = sadd.s32 %s268, 1
      %s270 = scalar_select %p267, %s268, %s269
      %p273 = pneg %p267
      %p274 = scmp.eq.s32.totalorder %s18, 1
      %p275 = por %p273, %p274
      %p276 = scmp.ne.s32.totalorder %s268, %s271
      %p277 = scmp.eq.s32.totalorder %s18, 0
      %p278 = por %p276, %p277
      %p279 = scmp.ne.s32.totalorder %s268, %s271
      %p280 = scmp.eq.s32.totalorder %s23, 1
      %p281 = por %p279, %p280
      %p282 = scmp.ne.s32.totalorder %s271, %s272
      %p283 = scmp.eq.s32.totalorder %s23, 0
      %p284 = por %p282, %p283
      %p285 = scmp.ne.s32.totalorder %s271, %s272
      %p286 = scmp.eq.s32.totalorder %s24, 1
      %p287 = por %p285, %p286
      %p289 = scmp.ne.s32.totalorder %s272, %s288
      %p290 = scmp.eq.s32.totalorder %s24, 0
      %p291 = por %p289, %p290
      %p292 = scmp.le.s32.totalorder 1, %s18
      %p293 = scmp.lt.s32.totalorder %s18, 3
      %p294 = pnand %p292, %p293
      %p295 = pneg %p294
      // Predicated region
      $region9: #{distil_bert_wrap_forward.1} parent=5 // pred_check
        _
      $region10: #{distil_bert_wrap_forward.1} parent=5 // pred_check_branch
        %297 = sbr.rel (%p294) target = $region12
      $region11: #{distil_bert_wrap_forward.1} parent=5 // pred_region
        %s298 = ssub.s32 %s18, 1
        // Predicated region
        $region13: #{distil_bert_wrap_forward.1} parent=11 // pred_check
          %p299 = pneg %p39
        $region14: #{distil_bert_wrap_forward.1} parent=11 // pred_check_branch
          %301 = sbr.rel (%p299) target = $region16
        $region15: #{distil_bert_wrap_forward.1} parent=11 // pred_region
          _
        $region16: #{distil_bert_wrap_forward.1} parent=11 // pred_fallthru
          _
        // Predicated region
        $region17: #{distil_bert_wrap_forward.1} parent=11 // pred_check
          %p302 = pneg %p60
        $region18: #{distil_bert_wrap_forward.1} parent=11 // pred_check_branch
          %304 = sbr.rel (%p302) target = $region20
        $region19: #{distil_bert_wrap_forward.1} parent=11 // pred_region
          _
        $region20: #{distil_bert_wrap_forward.1} parent=11 // pred_fallthru
          _
        // Predicated region
        $region21: #{distil_bert_wrap_forward.1} parent=11 // pred_check
          %p305 = pneg %p81
        $region22: #{distil_bert_wrap_forward.1} parent=11 // pred_check_branch
          %307 = sbr.rel (%p305) target = $region24
        $region23: #{distil_bert_wrap_forward.1} parent=11 // pred_region
          _
        $region24: #{distil_bert_wrap_forward.1} parent=11 // pred_fallthru
          _
      $region12: #{distil_bert_wrap_forward.1} parent=5 // pred_fallthru
        _
      %p308 = scmp.lt.s32.totalorder %s18, 2
      // Predicated region
      $region25: #{distil_bert_wrap_forward.1} parent=5 // pred_check
        %p309 = pneg %p308
      $region26: #{distil_bert_wrap_forward.1} parent=5 // pred_check_branch
        %311 = sbr.rel (%p309) target = $region28
      $region27: #{distil_bert_wrap_forward.1} parent=5 // pred_region
        // Predicated region
        $region29: #{distil_bert_wrap_forward.1} parent=27 // pred_check
          %p312 = pneg %p101
        $region30: #{distil_bert_wrap_forward.1} parent=27 // pred_check_branch
          %314 = sbr.rel (%p312) target = $region32
        $region31: #{distil_bert_wrap_forward.1} parent=27 // pred_region
          %p315 = scmp.lt.s32.totalorder %s18, 1
          %s316 = scalar_select %p315, %s18, 1
          %s317 = smul.addr %s316, 4
          %s318 = smul.addr %s317, 4
          %s319 = scalar_lea.vmem %s3, %s318
        $region32: #{distil_bert_wrap_forward.1} parent=27 // pred_fallthru
          _
        // Predicated region
        $region33: #{distil_bert_wrap_forward.1} parent=27 // pred_check
          %p320 = pneg %p127
        $region34: #{distil_bert_wrap_forward.1} parent=27 // pred_check_branch
          %322 = sbr.rel (%p320) target = $region36
        $region35: #{distil_bert_wrap_forward.1} parent=27 // pred_region
          %p323 = scmp.lt.s32.totalorder %s18, 1
          %s324 = scalar_select %p323, %s18, 1
          %s325 = smul.addr %s324, 4
          %s326 = smul.addr %s325, 4
          %s327 = scalar_lea.vmem %s4, %s326
        $region36: #{distil_bert_wrap_forward.1} parent=27 // pred_fallthru
          _
        // Predicated region
        $region37: #{distil_bert_wrap_forward.1} parent=27 // pred_check
          %p328 = pneg %p153
        $region38: #{distil_bert_wrap_forward.1} parent=27 // pred_check_branch
          %330 = sbr.rel (%p328) target = $region40
        $region39: #{distil_bert_wrap_forward.1} parent=27 // pred_region
          %p331 = scmp.lt.s32.totalorder %s18, 1
          %s332 = scalar_select %p331, %s18, 1
          %s333 = smul.addr %s332, 4
          %s334 = smul.addr %s333, 4
          %s335 = scalar_lea.vmem %s5, %s334
        $region40: #{distil_bert_wrap_forward.1} parent=27 // pred_fallthru
          _
        // Predicated region
        $region41: #{distil_bert_wrap_forward.1} parent=27 // pred_check
          %p336 = pneg %p179
        $region42: #{distil_bert_wrap_forward.1} parent=27 // pred_check_branch
          %338 = sbr.rel (%p336) target = $region44
        $region43: #{distil_bert_wrap_forward.1} parent=27 // pred_region
          %p339 = scmp.lt.s32.totalorder %s18, 1
          %s340 = scalar_select %p339, %s18, 1
          %s341 = smul.addr %s340, 8
          %s342 = smul.addr %s341, 4
          %s343 = scalar_lea.vmem %s6, %s342
        $region44: #{distil_bert_wrap_forward.1} parent=27 // pred_fallthru
          _
        // Predicated region
        $region45: #{distil_bert_wrap_forward.1} parent=27 // pred_check
          %p344 = pneg %p205
        $region46: #{distil_bert_wrap_forward.1} parent=27 // pred_check_branch
          %346 = sbr.rel (%p344) target = $region48
        $region47: #{distil_bert_wrap_forward.1} parent=27 // pred_region
          %p347 = scmp.lt.s32.totalorder %s18, 1
          %s348 = scalar_select %p347, %s18, 1
          %s349 = smul.addr %s348, 8
          %s350 = scalar_lea.vmem %s7, %s349
        $region48: #{distil_bert_wrap_forward.1} parent=27 // pred_fallthru
          _
      $region28: #{distil_bert_wrap_forward.1} parent=5 // pred_fallthru
        _
      %p351 = scmp.le.s32.totalorder 1, %s18
      %p352 = scmp.lt.s32.totalorder %s18, 3
      %p353 = pnand %p351, %p352
      %p354 = pneg %p353
      // Predicated region
      $region49: #{distil_bert_wrap_forward.1} parent=5 // pred_check
        _
      $region50: #{distil_bert_wrap_forward.1} parent=5 // pred_check_branch
        %356 = sbr.rel (%p353) target = $region52
      $region51: #{distil_bert_wrap_forward.1} parent=5 // pred_region
        %s357 = ssub.s32 %s18, 1
        %p358 = pneg %p39
        %p359 = pneg %p36
        %p360 = pneg %p60
        %p361 = pneg %p57
        %p362 = pneg %p81
        %p363 = pneg %p78
        %p364 = scmp.lt.s32.totalorder %s23, 1
        %s365 = scalar_select %p364, %s23, 1
        %s366 = smul.addr %s365, 4
        %s367 = smul.addr %s366, 4
        %s368 = scalar_lea.vmem %s3, %s367
        %p369 = pneg %p107
        %p370 = pneg %p104
        %p371 = scmp.lt.s32.totalorder %s23, 1
        %s372 = scalar_select %p371, %s23, 1
        %s373 = smul.addr %s372, 4
        %s374 = smul.addr %s373, 4
        %s375 = scalar_lea.vmem %s4, %s374
        %p376 = pneg %p133
        %p377 = pneg %p130
        %p378 = scmp.lt.s32.totalorder %s23, 1
        %s379 = scalar_select %p378, %s23, 1
        %s380 = smul.addr %s379, 4
        %s381 = smul.addr %s380, 4
        %s382 = scalar_lea.vmem %s5, %s381
        %p383 = pneg %p159
        %p384 = pneg %p156
        %p385 = scmp.lt.s32.totalorder %s23, 1
        %s386 = scalar_select %p385, %s23, 1
        %s387 = smul.addr %s386, 8
        %s388 = smul.addr %s387, 4
        %s389 = scalar_lea.vmem %s6, %s388
        %p390 = pneg %p185
        %p391 = pneg %p182
        %p392 = scmp.lt.s32.totalorder %s23, 1
        %s393 = scalar_select %p392, %s23, 1
        %s394 = smul.addr %s393, 8
        %s395 = scalar_lea.vmem %s7, %s394
        %p396 = pneg %p211
        %p397 = pneg %p208
        %p398 = pneg %p232
        %p399 = pneg %p229
        %p400 = pneg %p258
        %p401 = pneg %p255
        %p402 = scmp.lt.s32.totalorder %s23, 1
        %s403 = scalar_select %p402, %s23, 1
        %s404 = smul.addr %s403, 2
        %s405 = smul.addr %s404, 8
        %s406 = scalar_lea.vmem %s9, %s405
        %p407 = pneg %p284
        %p408 = pneg %p281
        %p409 = scmp.lt.s32.totalorder %s23, 1
        %s410 = scalar_select %p409, %s23, 1
        %s411 = smul.addr %s410, 8
        %s412 = smul.addr %s411, 8
        %s413 = scalar_lea.vmem %s10, %s412
        %p414 = scmp.lt.s32.totalorder %s23, 1
        %s415 = scalar_select %p414, %s23, 1
        %s416 = smul.addr %s415, 4
        %s417 = smul.addr %s416, 4
        %s418 = scalar_lea.vmem %s3, %s417
        %p419 = scmp.lt.s32.totalorder %s23, 1
        %s420 = scalar_select %p419, %s23, 1
        %s421 = smul.addr %s420, 4
        %s422 = smul.addr %s421, 4
        %s423 = scalar_lea.vmem %s4, %s422
        %p424 = scmp.lt.s32.totalorder %s23, 1
        %s425 = scalar_select %p424, %s23, 1
        %s426 = smul.addr %s425, 4
        %s427 = smul.addr %s426, 4
        %s428 = scalar_lea.vmem %s5, %s427
        %p429 = scmp.lt.s32.totalorder %s23, 1
        %s430 = scalar_select %p429, %s23, 1
        %s431 = smul.addr %s430, 8
        %s432 = smul.addr %s431, 4
        %s433 = scalar_lea.vmem %s6, %s432
        %p434 = scmp.lt.s32.totalorder %s23, 1
        %s435 = scalar_select %p434, %s23, 1
        %s436 = smul.addr %s435, 8
        %s437 = scalar_lea.vmem %s7, %s436
        %p438 = scmp.lt.s32.totalorder %s23, 1
        %s439 = scalar_select %p438, %s23, 1
        %s440 = smul.addr %s439, 2
        %s441 = smul.addr %s440, 8
        %s442 = scalar_lea.vmem %s9, %s441
        %p443 = scmp.lt.s32.totalorder %s23, 1
        %s444 = scalar_select %p443, %s23, 1
        %s445 = smul.addr %s444, 8
        %s446 = smul.addr %s445, 8
        %s447 = scalar_lea.vmem %s10, %s446
        %p449 = scmp.eq.s32.totalorder %s23, 0
        // Predicated region
        $region53: #{distil_bert_wrap_forward.1} parent=51 // pred_check
          %p450 = pneg %p449
        $region54: #{distil_bert_wrap_forward.1} parent=51 // pred_check_branch
          %452 = sbr.rel (%p450) target = $region56
        $region55: #{distil_bert_wrap_forward.1} parent=51 // pred_region
          %v453 = vld [vmem:[%s0] sm:$0xff]
          %v454 = vld [vmem:[%s0 + $0x8] sm:$0xff]
          %v455 = vld [vmem:[%s2] sm:$0x1]
          %v456 = vld [vmem:[%s2 + $0x1] sm:$0x1]
          %vm457 = vcmask 261120
          %v458 = vsel %vm457, %v453, 0.0
          %459 = vadd.xlane.f32.xlu0 %v458
          %v460 = vpop.xlane.xlu0 %459
          %v461 = vsel %vm457, %v454, 0.0
          %462 = vadd.xlane.f32.xlu0 %v461
          %v463 = vpop.xlane.xlu0 %462
          %v464 = vrcp.pop 32.0
          %v465 = vmul.f32 32.0, %v464
          %v466 = vsub.f32 1.0, %v465
          %v467 = vmul.f32 %v464, %v466
          %v468 = vadd.f32 %v464, %v467
          %vm469 = vweird.f32 %v464
          %v470 = vsel %vm469, %v464, %v468
          %v471 = vmul.f32 %v460, %v470
          %v472 = vmul.f32 %v463, %v470
          %v473 = vsub.f32 %v453, %v471
          %v474 = vsub.f32 %v454, %v472
          %v475 = vmul.f32 %v473, %v473
          %v476 = vmul.f32 %v474, %v474
          %v477 = vsel %vm457, %v475, 0.0
          %478 = vadd.xlane.f32.xlu0 %v477
          %v479 = vpop.xlane.xlu0 %478
          %v480 = vsel %vm457, %v476, 0.0
          %481 = vadd.xlane.f32.xlu0 %v480
          %v482 = vpop.xlane.xlu0 %481
          %v483 = vmul.f32 %v479, %v470
          %v484 = vmul.f32 %v482, %v470
          %v485 = vadd.f32 %v483, 1e-12
          %v486 = vadd.f32 %v484, 1e-12
          %v487 = vrsqrt.pop %v485
          %v488 = vmul.f32 %v487, %v485
          %v489 = vmul.f32 %v488, %v487
          %v490 = vmul.f32 0.5, %v489
          %v491 = vsub.f32 1.5, %v490
          %v492 = vmul.f32 %v487, %v491
          %vm493 = vweird.f32 %v485
          %vm494 = vweird.f32 %v487
          %vm495 = vmor %vm493, %vm494
          %v496 = vsel %vm495, %v487, %v492
          %v497 = vrsqrt.pop %v486
          %v498 = vmul.f32 %v497, %v486
          %v499 = vmul.f32 %v498, %v497
          %v500 = vmul.f32 0.5, %v499
          %v501 = vsub.f32 1.5, %v500
          %v502 = vmul.f32 %v497, %v501
          %vm503 = vweird.f32 %v486
          %vm504 = vweird.f32 %v497
          %vm505 = vmor %vm503, %vm504
          %v506 = vsel %vm505, %v497, %v502
          %v507 = vmul.f32 %v473, %v496
          %v508 = vmul.f32 %v474, %v506
          %v509 = vperm.slane %v455, 0
          %v510 = vmul.f32 %v507, %v509
          %v511 = vmul.f32 %v508, %v509
          %v512 = vperm.slane %v456, 0
          %v513 = vadd.f32 %v510, %v512
          %v514 = vadd.f32 %v511, %v512
          %515 = vst.msk [vmem:[#allocation2] sm:$0xff] %vm457, %v513
          %516 = vst.msk [vmem:[#allocation2 + $0x8] sm:$0xff] %vm457, %v514
          %517 = vst.msk [vmem:[#allocation3] sm:$0xff] %vm457, %v513
          %518 = vst.msk [vmem:[#allocation3 + $0x8] sm:$0xff] %vm457, %v514
        $region56: #{distil_bert_wrap_forward.1} parent=51 // pred_fallthru
          _
        %v519 = vld [vmem:[#allocation2] sm:$0xff]
        %v520 = vld [vmem:[#allocation2 + $0x8] sm:$0xff]
        %v521 = vld [vmem:[%s1] sm:$0x3]
        %v522 = vld [vmem:[%s437] sm:$0xff]
        %v523 = vpack.c.bf16 %v520, %v519
        %v524 = vld [vmem:[%s418] sm:$0xf]
        %v525 = vld [vmem:[%s418 + $0x4] sm:$0xf]
        %v526 = vld [vmem:[%s418 + $0x8] sm:$0xf]
        %v527 = vld [vmem:[%s418 + $0xc] sm:$0xf]
        %v528 = vperm.slane %v522, 0
        %v533 = vunpack.c.l.b16 %v524
        %v534 = vunpack.c.l.b16 %v525
        %v535 = vunpack.c.l.b16 %v526
        %v536 = vunpack.c.l.b16 %v527
        %v537 = vpack.c.b16 %v534, %v533
        %v538 = vpack.c.b16 %v536, %v535
        %vm541 = vcmask 261120
        %v543 = vsel %vm541, %v523, 0
        %545 = vmatpush.bf16.msra.mxu0 0
        %546 = vmatpush.bf16.msra.mxu0 0
        %547 = vmatpush.bf16.msra.mxu0 0
        %548 = vmatpush.bf16.msra.mxu0 0
        %549 = vmatpush.bf16.msra.mxu0 0
        %550 = vmatpush.bf16.msra.mxu0 0
        %551 = vmatpush.bf16.msra.mxu0 %v538
        %552 = vmatpush.bf16.msra.mxu0 %v537
        %553 = vmatmul.bf16.gmra.mxu0 %v543
        %v554 = vpop.f32.mrf.mxu0
        %v555 = vadd.f32 %v528, %v554
        %v556 = vpop.f32.mrf.mxu0
        %v557 = vadd.f32 %v528, %v556
        %558 = vdwg.mxu0
        %v559 = vperm.slane %v521, 0
        %561 = vrot.lane.b32.xlu0 %v555, 96
        %v562 = vpop.permute.xlu0 %561
        %vm563 = vcmask 64512
        %v564 = vsel %vm563, %v555, 0
        %v566 = vsel %vm563, %v562, 0
        %568 = vmatpush.xpose.msra.mxu0 0.0
        %569 = vmatpush.xpose.msra.mxu0 0.0
        %570 = vmatpush.xpose.msra.mxu0 0.0
        %571 = vmatpush.xpose.msra.mxu0 0.0
        %572 = vmatpush.xpose.msra.mxu0 0.0
        %573 = vmatpush.xpose.msra.mxu0 0.0
        %574 = vmatpush.xpose.msra.mxu0 0.0
        %575 = vmatpush.xpose.msra.mxu0 0.0
        %576 = vmatpush.xpose.msra.mxu0 0.0
        %577 = vmatpush.xpose.msra.mxu0 0.0
        %578 = vmatpush.xpose.msra.mxu0 0.0
        %579 = vmatpush.xpose.msra.mxu0 0.0
        %580 = vmatpush.xpose.msra.mxu0 0.0
        %581 = vmatpush.xpose.msra.mxu0 0.0
        %582 = vmatpush.xpose.msra.mxu0 0.0
        %583 = vmatpush.xpose.msra.mxu0 %v566
        %584 = vmatmul.f32.gmra.mxu0 %v564
        %v585 = vpop.f32.mrf.mxu0
        %v586 = vadd.f32 %v559, %v585
        %587 = vdwg.mxu0
        %588 = vrot.lane.b32.xlu0 %v555, 120
        %v589 = vpop.permute.xlu0 %588
        %590 = vrot.lane.b32.xlu0 %v555, 88
        %v591 = vpop.permute.xlu0 %590
        %v592 = vsel %vm563, %v589, 0
        %v594 = vsel %vm563, %v591, 0
        %596 = vmatpush.xpose.msra.mxu0 0.0
        %597 = vmatpush.xpose.msra.mxu0 0.0
        %598 = vmatpush.xpose.msra.mxu0 0.0
        %599 = vmatpush.xpose.msra.mxu0 0.0
        %600 = vmatpush.xpose.msra.mxu0 0.0
        %601 = vmatpush.xpose.msra.mxu0 0.0
        %602 = vmatpush.xpose.msra.mxu0 0.0
        %603 = vmatpush.xpose.msra.mxu0 0.0
        %604 = vmatpush.xpose.msra.mxu0 0.0
        %605 = vmatpush.xpose.msra.mxu0 0.0
        %606 = vmatpush.xpose.msra.mxu0 0.0
        %607 = vmatpush.xpose.msra.mxu0 0.0
        %608 = vmatpush.xpose.msra.mxu0 0.0
        %609 = vmatpush.xpose.msra.mxu0 0.0
        %610 = vmatpush.xpose.msra.mxu0 0.0
        %611 = vmatpush.xpose.msra.mxu0 %v594
        %612 = vmatmul.f32.gmra.mxu0 %v592
        %v613 = vpop.f32.mrf.mxu0
        %v614 = vadd.f32 %v559, %v613
        %615 = vdwg.mxu0
        %616 = vrot.lane.b32.xlu0 %v555, 112
        %v617 = vpop.permute.xlu0 %616
        %618 = vrot.lane.b32.xlu0 %v555, 80
        %v619 = vpop.permute.xlu0 %618
        %v620 = vsel %vm563, %v617, 0
        %v622 = vsel %vm563, %v619, 0
        %624 = vmatpush.xpose.msra.mxu0 0.0
        %625 = vmatpush.xpose.msra.mxu0 0.0
        %626 = vmatpush.xpose.msra.mxu0 0.0
        %627 = vmatpush.xpose.msra.mxu0 0.0
        %628 = vmatpush.xpose.msra.mxu0 0.0
        %629 = vmatpush.xpose.msra.mxu0 0.0
        %630 = vmatpush.xpose.msra.mxu0 0.0
        %631 = vmatpush.xpose.msra.mxu0 0.0
        %632 = vmatpush.xpose.msra.mxu0 0.0
        %633 = vmatpush.xpose.msra.mxu0 0.0
        %634 = vmatpush.xpose.msra.mxu0 0.0
        %635 = vmatpush.xpose.msra.mxu0 0.0
        %636 = vmatpush.xpose.msra.mxu0 0.0
        %637 = vmatpush.xpose.msra.mxu0 0.0
        %638 = vmatpush.xpose.msra.mxu0 0.0
        %639 = vmatpush.xpose.msra.mxu0 %v622
        %640 = vmatmul.f32.gmra.mxu0 %v620
        %v641 = vpop.f32.mrf.mxu0
        %v642 = vadd.f32 %v559, %v641
        %643 = vdwg.mxu0
        %644 = vrot.lane.b32.xlu0 %v555, 104
        %v645 = vpop.permute.xlu0 %644
        %646 = vrot.lane.b32.xlu0 %v555, 72
        %v647 = vpop.permute.xlu0 %646
        %v648 = vsel %vm563, %v645, 0
        %v650 = vsel %vm563, %v647, 0
        %652 = vmatpush.xpose.msra.mxu0 0.0
        %653 = vmatpush.xpose.msra.mxu0 0.0
        %654 = vmatpush.xpose.msra.mxu0 0.0
        %655 = vmatpush.xpose.msra.mxu0 0.0
        %656 = vmatpush.xpose.msra.mxu0 0.0
        %657 = vmatpush.xpose.msra.mxu0 0.0
        %658 = vmatpush.xpose.msra.mxu0 0.0
        %659 = vmatpush.xpose.msra.mxu0 0.0
        %660 = vmatpush.xpose.msra.mxu0 0.0
        %661 = vmatpush.xpose.msra.mxu0 0.0
        %662 = vmatpush.xpose.msra.mxu0 0.0
        %663 = vmatpush.xpose.msra.mxu0 0.0
        %664 = vmatpush.xpose.msra.mxu0 0.0
        %665 = vmatpush.xpose.msra.mxu0 0.0
        %666 = vmatpush.xpose.msra.mxu0 0.0
        %667 = vmatpush.xpose.msra.mxu0 %v650
        %668 = vmatmul.f32.gmra.mxu0 %v648
        %v669 = vpop.f32.mrf.mxu0
        %v670 = vadd.f32 %v559, %v669
        %671 = vdwg.mxu0
        %v672 = vperm.slane %v521, 1
        %674 = vrot.lane.b32.xlu0 %v557, 96
        %v675 = vpop.permute.xlu0 %674
        %v676 = vsel %vm563, %v557, 0
        %v678 = vsel %vm563, %v675, 0
        %680 = vmatpush.xpose.msra.mxu0 0.0
        %681 = vmatpush.xpose.msra.mxu0 0.0
        %682 = vmatpush.xpose.msra.mxu0 0.0
        %683 = vmatpush.xpose.msra.mxu0 0.0
        %684 = vmatpush.xpose.msra.mxu0 0.0
        %685 = vmatpush.xpose.msra.mxu0 0.0
        %686 = vmatpush.xpose.msra.mxu0 0.0
        %687 = vmatpush.xpose.msra.mxu0 0.0
        %688 = vmatpush.xpose.msra.mxu0 0.0
        %689 = vmatpush.xpose.msra.mxu0 0.0
        %690 = vmatpush.xpose.msra.mxu0 0.0
        %691 = vmatpush.xpose.msra.mxu0 0.0
        %692 = vmatpush.xpose.msra.mxu0 0.0
        %693 = vmatpush.xpose.msra.mxu0 0.0
        %694 = vmatpush.xpose.msra.mxu0 0.0
        %695 = vmatpush.xpose.msra.mxu0 %v678
        %696 = vmatmul.f32.gmra.mxu0 %v676
        %v697 = vpop.f32.mrf.mxu0
        %v698 = vadd.f32 %v672, %v697
        %699 = vdwg.mxu0
        %700 = vrot.lane.b32.xlu0 %v557, 120
        %v701 = vpop.permute.xlu0 %700
        %702 = vrot.lane.b32.xlu0 %v557, 88
        %v703 = vpop.permute.xlu0 %702
        %v704 = vsel %vm563, %v701, 0
        %v706 = vsel %vm563, %v703, 0
        %708 = vmatpush.xpose.msra.mxu0 0.0
        %709 = vmatpush.xpose.msra.mxu0 0.0
        %710 = vmatpush.xpose.msra.mxu0 0.0
        %711 = vmatpush.xpose.msra.mxu0 0.0
        %712 = vmatpush.xpose.msra.mxu0 0.0
        %713 = vmatpush.xpose.msra.mxu0 0.0
        %714 = vmatpush.xpose.msra.mxu0 0.0
        %715 = vmatpush.xpose.msra.mxu0 0.0
        %716 = vmatpush.xpose.msra.mxu0 0.0
        %717 = vmatpush.xpose.msra.mxu0 0.0
        %718 = vmatpush.xpose.msra.mxu0 0.0
        %719 = vmatpush.xpose.msra.mxu0 0.0
        %720 = vmatpush.xpose.msra.mxu0 0.0
        %721 = vmatpush.xpose.msra.mxu0 0.0
        %722 = vmatpush.xpose.msra.mxu0 0.0
        %723 = vmatpush.xpose.msra.mxu0 %v706
        %724 = vmatmul.f32.gmra.mxu0 %v704
        %v725 = vpop.f32.mrf.mxu0
        %v726 = vadd.f32 %v672, %v725
        %727 = vdwg.mxu0
        %728 = vrot.lane.b32.xlu0 %v557, 112
        %v729 = vpop.permute.xlu0 %728
        %730 = vrot.lane.b32.xlu0 %v557, 80
        %v731 = vpop.permute.xlu0 %730
        %v732 = vsel %vm563, %v729, 0
        %v734 = vsel %vm563, %v731, 0
        %736 = vmatpush.xpose.msra.mxu0 0.0
        %737 = vmatpush.xpose.msra.mxu0 0.0
        %738 = vmatpush.xpose.msra.mxu0 0.0
        %739 = vmatpush.xpose.msra.mxu0 0.0
        %740 = vmatpush.xpose.msra.mxu0 0.0
        %741 = vmatpush.xpose.msra.mxu0 0.0
        %742 = vmatpush.xpose.msra.mxu0 0.0
        %743 = vmatpush.xpose.msra.mxu0 0.0
        %744 = vmatpush.xpose.msra.mxu0 0.0
        %745 = vmatpush.xpose.msra.mxu0 0.0
        %746 = vmatpush.xpose.msra.mxu0 0.0
        %747 = vmatpush.xpose.msra.mxu0 0.0
        %748 = vmatpush.xpose.msra.mxu0 0.0
        %749 = vmatpush.xpose.msra.mxu0 0.0
        %750 = vmatpush.xpose.msra.mxu0 0.0
        %751 = vmatpush.xpose.msra.mxu0 %v734
        %752 = vmatmul.f32.gmra.mxu0 %v732
        %v753 = vpop.f32.mrf.mxu0
        %v754 = vadd.f32 %v672, %v753
        %755 = vdwg.mxu0
        %756 = vrot.lane.b32.xlu0 %v557, 104
        %v757 = vpop.permute.xlu0 %756
        %758 = vrot.lane.b32.xlu0 %v557, 72
        %v759 = vpop.permute.xlu0 %758
        %v760 = vsel %vm563, %v757, 0
        %v762 = vsel %vm563, %v759, 0
        %764 = vmatpush.xpose.msra.mxu0 0.0
        %765 = vmatpush.xpose.msra.mxu0 0.0
        %766 = vmatpush.xpose.msra.mxu0 0.0
        %767 = vmatpush.xpose.msra.mxu0 0.0
        %768 = vmatpush.xpose.msra.mxu0 0.0
        %769 = vmatpush.xpose.msra.mxu0 0.0
        %770 = vmatpush.xpose.msra.mxu0 0.0
        %771 = vmatpush.xpose.msra.mxu0 0.0
        %772 = vmatpush.xpose.msra.mxu0 0.0
        %773 = vmatpush.xpose.msra.mxu0 0.0
        %774 = vmatpush.xpose.msra.mxu0 0.0
        %775 = vmatpush.xpose.msra.mxu0 0.0
        %776 = vmatpush.xpose.msra.mxu0 0.0
        %777 = vmatpush.xpose.msra.mxu0 0.0
        %778 = vmatpush.xpose.msra.mxu0 0.0
        %779 = vmatpush.xpose.msra.mxu0 %v762
        %780 = vmatmul.f32.gmra.mxu0 %v760
        %v781 = vpop.f32.mrf.mxu0
        %v782 = vadd.f32 %v672, %v781
        %783 = vdwg.mxu0
        %v784 = vsel %vm563, %v586, -inf
        %785 = vmax.xlane.f32.xlu0 %v784
        %v786 = vpop.xlane.xlu0 %785
        %v787 = vsel %vm563, %v614, -inf
        %788 = vmax.xlane.f32.xlu0 %v787
        %v789 = vpop.xlane.xlu0 %788
        %v790 = vsel %vm563, %v642, -inf
        %791 = vmax.xlane.f32.xlu0 %v790
        %v792 = vpop.xlane.xlu0 %791
        %v793 = vsel %vm563, %v670, -inf
        %794 = vmax.xlane.f32.xlu0 %v793
        %v795 = vpop.xlane.xlu0 %794
        %v796 = vsel %vm563, %v698, -inf
        %797 = vmax.xlane.f32.xlu0 %v796
        %v798 = vpop.xlane.xlu0 %797
        %v799 = vsel %vm563, %v726, -inf
        %800 = vmax.xlane.f32.xlu0 %v799
        %v801 = vpop.xlane.xlu0 %800
        %v802 = vsel %vm563, %v754, -inf
        %803 = vmax.xlane.f32.xlu0 %v802
        %v804 = vpop.xlane.xlu0 %803
        %v805 = vsel %vm563, %v782, -inf
        %806 = vmax.xlane.f32.xlu0 %v805
        %v807 = vpop.xlane.xlu0 %806
        %v808 = vsub.f32 %v586, %v786
        %v809 = vsub.f32 %v614, %v789
        %v810 = vsub.f32 %v642, %v792
        %v811 = vsub.f32 %v670, %v795
        %v812 = vsub.f32 %v698, %v798
        %v813 = vsub.f32 %v726, %v801
        %v814 = vsub.f32 %v754, %v804
        %v815 = vsub.f32 %v782, %v807
        %v816 = vmul.f32 %v808, 1.442695
        %v817 = vpow.pop %v816
        %v818 = vmul.f32 %v809, 1.442695
        %v819 = vpow.pop %v818
        %v820 = vmul.f32 %v810, 1.442695
        %v821 = vpow.pop %v820
        %v822 = vmul.f32 %v811, 1.442695
        %v823 = vpow.pop %v822
        %v824 = vmul.f32 %v812, 1.442695
        %v825 = vpow.pop %v824
        %v826 = vmul.f32 %v813, 1.442695
        %v827 = vpow.pop %v826
        %v828 = vmul.f32 %v814, 1.442695
        %v829 = vpow.pop %v828
        %v830 = vmul.f32 %v815, 1.442695
        %v831 = vpow.pop %v830
        %v832 = vsel %vm563, %v817, 0.0
        %833 = vadd.xlane.f32.xlu0 %v832
        %v834 = vpop.xlane.xlu0 %833
        %v835 = vsel %vm563, %v819, 0.0
        %836 = vadd.xlane.f32.xlu0 %v835
        %v837 = vpop.xlane.xlu0 %836
        %v838 = vsel %vm563, %v821, 0.0
        %839 = vadd.xlane.f32.xlu0 %v838
        %v840 = vpop.xlane.xlu0 %839
        %v841 = vsel %vm563, %v823, 0.0
        %842 = vadd.xlane.f32.xlu0 %v841
        %v843 = vpop.xlane.xlu0 %842
        %v844 = vsel %vm563, %v825, 0.0
        %845 = vadd.xlane.f32.xlu0 %v844
        %v846 = vpop.xlane.xlu0 %845
        %v847 = vsel %vm563, %v827, 0.0
        %848 = vadd.xlane.f32.xlu0 %v847
        %v849 = vpop.xlane.xlu0 %848
        %v850 = vsel %vm563, %v829, 0.0
        %851 = vadd.xlane.f32.xlu0 %v850
        %v852 = vpop.xlane.xlu0 %851
        %v853 = vsel %vm563, %v831, 0.0
        %854 = vadd.xlane.f32.xlu0 %v853
        %v855 = vpop.xlane.xlu0 %854
        %v856 = vrcp.pop %v834
        %v857 = vmul.f32 %v834, %v856
        %v858 = vsub.f32 1.0, %v857
        %v859 = vmul.f32 %v856, %v858
        %v860 = vadd.f32 %v856, %v859
        %vm861 = vweird.f32 %v834
        %vm862 = vweird.f32 %v856
        %vm863 = vmor %vm861, %vm862
        %v864 = vsel %vm863, %v856, %v860
        %v865 = vand.u32 2147483647, %v834
        %vm866 = vcmp.eq.f32.partialorder %v865, 8.507059e+37
        %v867 = vand.u32 %v834, 2147483648
        %v868 = vor.u32 1.1754944e-38, %v867
        %v869 = vsel %vm866, %v868, %v864
        %v870 = vmul.f32 %v817, %v869
        %v871 = vrcp.pop %v837
        %v872 = vmul.f32 %v837, %v871
        %v873 = vsub.f32 1.0, %v872
        %v874 = vmul.f32 %v871, %v873
        %v875 = vadd.f32 %v871, %v874
        %vm876 = vweird.f32 %v837
        %vm877 = vweird.f32 %v871
        %vm878 = vmor %vm876, %vm877
        %v879 = vsel %vm878, %v871, %v875
        %v880 = vand.u32 2147483647, %v837
        %vm881 = vcmp.eq.f32.partialorder %v880, 8.507059e+37
        %v882 = vand.u32 %v837, 2147483648
        %v883 = vor.u32 1.1754944e-38, %v882
        %v884 = vsel %vm881, %v883, %v879
        %v885 = vmul.f32 %v819, %v884
        %v886 = vrcp.pop %v840
        %v887 = vmul.f32 %v840, %v886
        %v888 = vsub.f32 1.0, %v887
        %v889 = vmul.f32 %v886, %v888
        %v890 = vadd.f32 %v886, %v889
        %vm891 = vweird.f32 %v840
        %vm892 = vweird.f32 %v886
        %vm893 = vmor %vm891, %vm892
        %v894 = vsel %vm893, %v886, %v890
        %v895 = vand.u32 2147483647, %v840
        %vm896 = vcmp.eq.f32.partialorder %v895, 8.507059e+37
        %v897 = vand.u32 %v840, 2147483648
        %v898 = vor.u32 1.1754944e-38, %v897
        %v899 = vsel %vm896, %v898, %v894
        %v900 = vmul.f32 %v821, %v899
        %v901 = vrcp.pop %v843
        %v902 = vmul.f32 %v843, %v901
        %v903 = vsub.f32 1.0, %v902
        %v904 = vmul.f32 %v901, %v903
        %v905 = vadd.f32 %v901, %v904
        %vm906 = vweird.f32 %v843
        %vm907 = vweird.f32 %v901
        %vm908 = vmor %vm906, %vm907
        %v909 = vsel %vm908, %v901, %v905
        %v910 = vand.u32 2147483647, %v843
        %vm911 = vcmp.eq.f32.partialorder %v910, 8.507059e+37
        %v912 = vand.u32 %v843, 2147483648
        %v913 = vor.u32 1.1754944e-38, %v912
        %v914 = vsel %vm911, %v913, %v909
        %v915 = vmul.f32 %v823, %v914
        %v916 = vrcp.pop %v846
        %v917 = vmul.f32 %v846, %v916
        %v918 = vsub.f32 1.0, %v917
        %v919 = vmul.f32 %v916, %v918
        %v920 = vadd.f32 %v916, %v919
        %vm921 = vweird.f32 %v846
        %vm922 = vweird.f32 %v916
        %vm923 = vmor %vm921, %vm922
        %v924 = vsel %vm923, %v916, %v920
        %v925 = vand.u32 2147483647, %v846
        %vm926 = vcmp.eq.f32.partialorder %v925, 8.507059e+37
        %v927 = vand.u32 %v846, 2147483648
        %v928 = vor.u32 1.1754944e-38, %v927
        %v929 = vsel %vm926, %v928, %v924
        %v930 = vmul.f32 %v825, %v929
        %v931 = vrcp.pop %v849
        %v932 = vmul.f32 %v849, %v931
        %v933 = vsub.f32 1.0, %v932
        %v934 = vmul.f32 %v931, %v933
        %v935 = vadd.f32 %v931, %v934
        %vm936 = vweird.f32 %v849
        %vm937 = vweird.f32 %v931
        %vm938 = vmor %vm936, %vm937
        %v939 = vsel %vm938, %v931, %v935
        %v940 = vand.u32 2147483647, %v849
        %vm941 = vcmp.eq.f32.partialorder %v940, 8.507059e+37
        %v942 = vand.u32 %v849, 2147483648
        %v943 = vor.u32 1.1754944e-38, %v942
        %v944 = vsel %vm941, %v943, %v939
        %v945 = vmul.f32 %v827, %v944
        %v946 = vrcp.pop %v852
        %v947 = vmul.f32 %v852, %v946
        %v948 = vsub.f32 1.0, %v947
        %v949 = vmul.f32 %v946, %v948
        %v950 = vadd.f32 %v946, %v949
        %vm951 = vweird.f32 %v852
        %vm952 = vweird.f32 %v946
        %vm953 = vmor %vm951, %vm952
        %v954 = vsel %vm953, %v946, %v950
        %v955 = vand.u32 2147483647, %v852
        %vm956 = vcmp.eq.f32.partialorder %v955, 8.507059e+37
        %v957 = vand.u32 %v852, 2147483648
        %v958 = vor.u32 1.1754944e-38, %v957
        %v959 = vsel %vm956, %v958, %v954
        %v960 = vmul.f32 %v829, %v959
        %v961 = vrcp.pop %v855
        %v962 = vmul.f32 %v855, %v961
        %v963 = vsub.f32 1.0, %v962
        %v964 = vmul.f32 %v961, %v963
        %v965 = vadd.f32 %v961, %v964
        %vm966 = vweird.f32 %v855
        %vm967 = vweird.f32 %v961
        %vm968 = vmor %vm966, %vm967
        %v969 = vsel %vm968, %v961, %v965
        %v970 = vand.u32 2147483647, %v855
        %vm971 = vcmp.eq.f32.partialorder %v970, 8.507059e+37
        %v972 = vand.u32 %v855, 2147483648
        %v973 = vor.u32 1.1754944e-38, %v972
        %v974 = vsel %vm971, %v973, %v969
        %v975 = vmul.f32 %v831, %v974
        %976 = vst.msk [vmem:[%s447] sm:$0xff] %vm563, %v870
        %977 = vst.msk [vmem:[%s447 + $0x8] sm:$0xff] %vm563, %v885
        %978 = vst.msk [vmem:[%s447 + $0x10] sm:$0xff] %vm563, %v900
        %979 = vst.msk [vmem:[%s447 + $0x18] sm:$0xff] %vm563, %v915
        %980 = vst.msk [vmem:[%s447 + $0x20] sm:$0xff] %vm563, %v930
        %981 = vst.msk [vmem:[%s447 + $0x28] sm:$0xff] %vm563, %v945
        %982 = vst.msk [vmem:[%s447 + $0x30] sm:$0xff] %vm563, %v960
        %983 = vst.msk [vmem:[%s447 + $0x38] sm:$0xff] %vm563, %v975
        %984 = vrot.lane.b32.xlu0 %v555, 64
        %v985 = vpop.permute.xlu0 %984
        %v988 = vsel %vm563, %v870, 0
        %990 = vmatpush.msra.mxu0 0.0
        %991 = vmatpush.msra.mxu0 0.0
        %992 = vmatpush.msra.mxu0 0.0
        %993 = vmatpush.msra.mxu0 0.0
        %994 = vmatpush.msra.mxu0 0.0
        %995 = vmatpush.msra.mxu0 0.0
        %996 = vmatpush.msra.mxu0 0.0
        %997 = vmatpush.msra.mxu0 0.0
        %998 = vmatpush.msra.mxu0 0.0
        %999 = vmatpush.msra.mxu0 0.0
        %1000 = vmatpush.msra.mxu0 0.0
        %1001 = vmatpush.msra.mxu0 0.0
        %1002 = vmatpush.msra.mxu0 0.0
        %1003 = vmatpush.msra.mxu0 0.0
        %1004 = vmatpush.msra.mxu0 0.0
        %1005 = vmatpush.msra.mxu0 %v985
        %1006 = vmatmul.f32.gmra.mxu0 %v988
        %v1007 = vpop.f32.mrf.mxu0
        %v1008 = vadd.f32 0.0, %v1007
        %1009 = vdwg.mxu0
        %1010 = vrot.lane.b32.xlu0 %v555, 56
        %v1011 = vpop.permute.xlu0 %1010
        %v1014 = vsel %vm563, %v885, 0
        %1016 = vmatpush.msra.mxu0 0.0
        %1017 = vmatpush.msra.mxu0 0.0
        %1018 = vmatpush.msra.mxu0 0.0
        %1019 = vmatpush.msra.mxu0 0.0
        %1020 = vmatpush.msra.mxu0 0.0
        %1021 = vmatpush.msra.mxu0 0.0
        %1022 = vmatpush.msra.mxu0 0.0
        %1023 = vmatpush.msra.mxu0 0.0
        %1024 = vmatpush.msra.mxu0 0.0
        %1025 = vmatpush.msra.mxu0 0.0
        %1026 = vmatpush.msra.mxu0 0.0
        %1027 = vmatpush.msra.mxu0 0.0
        %1028 = vmatpush.msra.mxu0 0.0
        %1029 = vmatpush.msra.mxu0 0.0
        %1030 = vmatpush.msra.mxu0 0.0
        %1031 = vmatpush.msra.mxu0 %v1011
        %1032 = vmatmul.f32.gmra.mxu0 %v1014
        %v1033 = vpop.f32.mrf.mxu0
        %v1034 = vadd.f32 0.0, %v1033
        %1035 = vdwg.mxu0
        %1036 = vrot.lane.b32.xlu0 %v555, 48
        %v1037 = vpop.permute.xlu0 %1036
        %v1040 = vsel %vm563, %v900, 0
        %1042 = vmatpush.msra.mxu0 0.0
        %1043 = vmatpush.msra.mxu0 0.0
        %1044 = vmatpush.msra.mxu0 0.0
        %1045 = vmatpush.msra.mxu0 0.0
        %1046 = vmatpush.msra.mxu0 0.0
        %1047 = vmatpush.msra.mxu0 0.0
        %1048 = vmatpush.msra.mxu0 0.0
        %1049 = vmatpush.msra.mxu0 0.0
        %1050 = vmatpush.msra.mxu0 0.0
        %1051 = vmatpush.msra.mxu0 0.0
        %1052 = vmatpush.msra.mxu0 0.0
        %1053 = vmatpush.msra.mxu0 0.0
        %1054 = vmatpush.msra.mxu0 0.0
        %1055 = vmatpush.msra.mxu0 0.0
        %1056 = vmatpush.msra.mxu0 0.0
        %1057 = vmatpush.msra.mxu0 %v1037
        %1058 = vmatmul.f32.gmra.mxu0 %v1040
        %v1059 = vpop.f32.mrf.mxu0
        %v1060 = vadd.f32 0.0, %v1059
        %1061 = vdwg.mxu0
        %1062 = vrot.lane.b32.xlu0 %v555, 40
        %v1063 = vpop.permute.xlu0 %1062
        %v1066 = vsel %vm563, %v915, 0
        %1068 = vmatpush.msra.mxu0 0.0
        %1069 = vmatpush.msra.mxu0 0.0
        %1070 = vmatpush.msra.mxu0 0.0
        %1071 = vmatpush.msra.mxu0 0.0
        %1072 = vmatpush.msra.mxu0 0.0
        %1073 = vmatpush.msra.mxu0 0.0
        %1074 = vmatpush.msra.mxu0 0.0
        %1075 = vmatpush.msra.mxu0 0.0
        %1076 = vmatpush.msra.mxu0 0.0
        %1077 = vmatpush.msra.mxu0 0.0
        %1078 = vmatpush.msra.mxu0 0.0
        %1079 = vmatpush.msra.mxu0 0.0
        %1080 = vmatpush.msra.mxu0 0.0
        %1081 = vmatpush.msra.mxu0 0.0
        %1082 = vmatpush.msra.mxu0 0.0
        %1083 = vmatpush.msra.mxu0 %v1063
        %1084 = vmatmul.f32.gmra.mxu0 %v1066
        %v1085 = vpop.f32.mrf.mxu0
        %v1086 = vadd.f32 0.0, %v1085
        %1087 = vdwg.mxu0
        %1089 = vrot.lane.b32.xlu0 %v1034, 8
        %v1090 = vpop.permute.xlu0 %1089
        %1093 = vrot.lane.b32.xlu0 %v1060, 16
        %v1094 = vpop.permute.xlu0 %1093
        %1097 = vrot.lane.b32.xlu0 %v1086, 24
        %v1098 = vpop.permute.xlu0 %1097
        %v1100 = vsel %vm563, %v1008, %v1090
        %vm1101 = vcmask 130048
        %v1102 = vsel %vm1101, %v1100, %v1094
        %vm1103 = vcmask 195584
        %v1104 = vsel %vm1103, %v1102, %v1098
        %1105 = vrot.lane.b32.xlu0 %v557, 64
        %v1106 = vpop.permute.xlu0 %1105
        %v1109 = vsel %vm563, %v930, 0
        %1111 = vmatpush.msra.mxu0 0.0
        %1112 = vmatpush.msra.mxu0 0.0
        %1113 = vmatpush.msra.mxu0 0.0
        %1114 = vmatpush.msra.mxu0 0.0
        %1115 = vmatpush.msra.mxu0 0.0
        %1116 = vmatpush.msra.mxu0 0.0
        %1117 = vmatpush.msra.mxu0 0.0
        %1118 = vmatpush.msra.mxu0 0.0
        %1119 = vmatpush.msra.mxu0 0.0
        %1120 = vmatpush.msra.mxu0 0.0
        %1121 = vmatpush.msra.mxu0 0.0
        %1122 = vmatpush.msra.mxu0 0.0
        %1123 = vmatpush.msra.mxu0 0.0
        %1124 = vmatpush.msra.mxu0 0.0
        %1125 = vmatpush.msra.mxu0 0.0
        %1126 = vmatpush.msra.mxu0 %v1106
        %1127 = vmatmul.f32.gmra.mxu0 %v1109
        %v1128 = vpop.f32.mrf.mxu0
        %v1129 = vadd.f32 0.0, %v1128
        %1130 = vdwg.mxu0
        %1131 = vrot.lane.b32.xlu0 %v557, 56
        %v1132 = vpop.permute.xlu0 %1131
        %v1135 = vsel %vm563, %v945, 0
        %1137 = vmatpush.msra.mxu0 0.0
        %1138 = vmatpush.msra.mxu0 0.0
        %1139 = vmatpush.msra.mxu0 0.0
        %1140 = vmatpush.msra.mxu0 0.0
        %1141 = vmatpush.msra.mxu0 0.0
        %1142 = vmatpush.msra.mxu0 0.0
        %1143 = vmatpush.msra.mxu0 0.0
        %1144 = vmatpush.msra.mxu0 0.0
        %1145 = vmatpush.msra.mxu0 0.0
        %1146 = vmatpush.msra.mxu0 0.0
        %1147 = vmatpush.msra.mxu0 0.0
        %1148 = vmatpush.msra.mxu0 0.0
        %1149 = vmatpush.msra.mxu0 0.0
        %1150 = vmatpush.msra.mxu0 0.0
        %1151 = vmatpush.msra.mxu0 0.0
        %1152 = vmatpush.msra.mxu0 %v1132
        %1153 = vmatmul.f32.gmra.mxu0 %v1135
        %v1154 = vpop.f32.mrf.mxu0
        %v1155 = vadd.f32 0.0, %v1154
        %1156 = vdwg.mxu0
        %1157 = vrot.lane.b32.xlu0 %v557, 48
        %v1158 = vpop.permute.xlu0 %1157
        %v1161 = vsel %vm563, %v960, 0
        %1163 = vmatpush.msra.mxu0 0.0
        %1164 = vmatpush.msra.mxu0 0.0
        %1165 = vmatpush.msra.mxu0 0.0
        %1166 = vmatpush.msra.mxu0 0.0
        %1167 = vmatpush.msra.mxu0 0.0
        %1168 = vmatpush.msra.mxu0 0.0
        %1169 = vmatpush.msra.mxu0 0.0
        %1170 = vmatpush.msra.mxu0 0.0
        %1171 = vmatpush.msra.mxu0 0.0
        %1172 = vmatpush.msra.mxu0 0.0
        %1173 = vmatpush.msra.mxu0 0.0
        %1174 = vmatpush.msra.mxu0 0.0
        %1175 = vmatpush.msra.mxu0 0.0
        %1176 = vmatpush.msra.mxu0 0.0
        %1177 = vmatpush.msra.mxu0 0.0
        %1178 = vmatpush.msra.mxu0 %v1158
        %1179 = vmatmul.f32.gmra.mxu0 %v1161
        %v1180 = vpop.f32.mrf.mxu0
        %v1181 = vadd.f32 0.0, %v1180
        %1182 = vdwg.mxu0
        %1183 = vrot.lane.b32.xlu0 %v557, 40
        %v1184 = vpop.permute.xlu0 %1183
        %v1187 = vsel %vm563, %v975, 0
        %1189 = vmatpush.msra.mxu0 0.0
        %1190 = vmatpush.msra.mxu0 0.0
        %1191 = vmatpush.msra.mxu0 0.0
        %1192 = vmatpush.msra.mxu0 0.0
        %1193 = vmatpush.msra.mxu0 0.0
        %1194 = vmatpush.msra.mxu0 0.0
        %1195 = vmatpush.msra.mxu0 0.0
        %1196 = vmatpush.msra.mxu0 0.0
        %1197 = vmatpush.msra.mxu0 0.0
        %1198 = vmatpush.msra.mxu0 0.0
        %1199 = vmatpush.msra.mxu0 0.0
        %1200 = vmatpush.msra.mxu0 0.0
        %1201 = vmatpush.msra.mxu0 0.0
        %1202 = vmatpush.msra.mxu0 0.0
        %1203 = vmatpush.msra.mxu0 0.0
        %1204 = vmatpush.msra.mxu0 %v1184
        %1205 = vmatmul.f32.gmra.mxu0 %v1187
        %v1206 = vpop.f32.mrf.mxu0
        %v1207 = vadd.f32 0.0, %v1206
        %1208 = vdwg.mxu0
        %1210 = vrot.lane.b32.xlu0 %v1155, 8
        %v1211 = vpop.permute.xlu0 %1210
        %1214 = vrot.lane.b32.xlu0 %v1181, 16
        %v1215 = vpop.permute.xlu0 %1214
        %1218 = vrot.lane.b32.xlu0 %v1207, 24
        %v1219 = vpop.permute.xlu0 %1218
        %v1221 = vsel %vm563, %v1129, %v1211
        %v1222 = vsel %vm1101, %v1221, %v1215
        %v1223 = vsel %vm1103, %v1222, %v1219
        %v1224 = vpack.c.bf16 %v1223, %v1104
        %v1225 = vld [vmem:[%s423] sm:$0xf]
        %v1226 = vld [vmem:[%s423 + $0x4] sm:$0xf]
        %v1227 = vld [vmem:[%s423 + $0x8] sm:$0xf]
        %v1228 = vld [vmem:[%s423 + $0xc] sm:$0xf]
        %v1229 = vperm.slane %v522, 1
        %v1234 = vunpack.c.l.b16 %v1225
        %v1235 = vunpack.c.l.b16 %v1226
        %v1236 = vunpack.c.l.b16 %v1227
        %v1237 = vunpack.c.l.b16 %v1228
        %v1238 = vpack.c.b16 %v1235, %v1234
        %v1239 = vpack.c.b16 %v1237, %v1236
        %v1243 = vsel %vm541, %v1224, 0
        %1245 = vmatpush.bf16.msra.mxu0 0
        %1246 = vmatpush.bf16.msra.mxu0 0
        %1247 = vmatpush.bf16.msra.mxu0 0
        %1248 = vmatpush.bf16.msra.mxu0 0
        %1249 = vmatpush.bf16.msra.mxu0 0
        %1250 = vmatpush.bf16.msra.mxu0 0
        %1251 = vmatpush.bf16.msra.mxu0 %v1239
        %1252 = vmatpush.bf16.msra.mxu0 %v1238
        %1253 = vmatmul.bf16.gmra.mxu0 %v1243
        %v1254 = vpop.f32.mrf.mxu0
        %v1255 = vadd.f32 %v1229, %v1254
        %v1256 = vpop.f32.mrf.mxu0
        %v1257 = vadd.f32 %v1229, %v1256
        %1258 = vdwg.mxu0
        %v1259 = vadd.f32 %v1255, %v519
        %v1260 = vadd.f32 %v1257, %v520
        %v1261 = vsel %vm541, %v1259, 0.0
        %1262 = vadd.xlane.f32.xlu0 %v1261
        %v1263 = vpop.xlane.xlu0 %1262
        %v1264 = vsel %vm541, %v1260, 0.0
        %1265 = vadd.xlane.f32.xlu0 %v1264
        %v1266 = vpop.xlane.xlu0 %1265
        %v1267 = vrcp.pop 32.0
        %v1268 = vmul.f32 32.0, %v1267
        %v1269 = vsub.f32 1.0, %v1268
        %v1270 = vmul.f32 %v1267, %v1269
        %v1271 = vadd.f32 %v1267, %v1270
        %vm1272 = vweird.f32 %v1267
        %v1273 = vsel %vm1272, %v1267, %v1271
        %v1274 = vmul.f32 %v1263, %v1273
        %v1275 = vmul.f32 %v1266, %v1273
        %v1276 = vsub.f32 %v1259, %v1274
        %v1277 = vsub.f32 %v1260, %v1275
        %v1278 = vmul.f32 %v1276, %v1276
        %v1279 = vmul.f32 %v1277, %v1277
        %v1280 = vsel %vm541, %v1278, 0.0
        %1281 = vadd.xlane.f32.xlu0 %v1280
        %v1282 = vpop.xlane.xlu0 %1281
        %v1283 = vsel %vm541, %v1279, 0.0
        %1284 = vadd.xlane.f32.xlu0 %v1283
        %v1285 = vpop.xlane.xlu0 %1284
        %v1286 = vmul.f32 %v1282, %v1273
        %v1287 = vmul.f32 %v1285, %v1273
        %v1288 = vadd.f32 %v1286, 1e-12
        %v1289 = vadd.f32 %v1287, 1e-12
        %v1290 = vrsqrt.pop %v1288
        %v1291 = vmul.f32 %v1290, %v1288
        %v1292 = vmul.f32 %v1291, %v1290
        %v1293 = vmul.f32 0.5, %v1292
        %v1294 = vsub.f32 1.5, %v1293
        %v1295 = vmul.f32 %v1290, %v1294
        %vm1296 = vweird.f32 %v1288
        %vm1297 = vweird.f32 %v1290
        %vm1298 = vmor %vm1296, %vm1297
        %v1299 = vsel %vm1298, %v1290, %v1295
        %v1300 = vrsqrt.pop %v1289
        %v1301 = vmul.f32 %v1300, %v1289
        %v1302 = vmul.f32 %v1301, %v1300
        %v1303 = vmul.f32 0.5, %v1302
        %v1304 = vsub.f32 1.5, %v1303
        %v1305 = vmul.f32 %v1300, %v1304
        %vm1306 = vweird.f32 %v1289
        %vm1307 = vweird.f32 %v1300
        %vm1308 = vmor %vm1306, %vm1307
        %v1309 = vsel %vm1308, %v1300, %v1305
        %v1310 = vmul.f32 %v1276, %v1299
        %v1311 = vmul.f32 %v1277, %v1309
        %v1312 = vperm.slane %v522, 2
        %v1313 = vmul.f32 %v1310, %v1312
        %v1314 = vmul.f32 %v1311, %v1312
        %v1315 = vperm.slane %v522, 3
        %v1316 = vadd.f32 %v1313, %v1315
        %v1317 = vadd.f32 %v1314, %v1315
        %v1318 = vpack.c.bf16 %v1317, %v1316
        %v1319 = vld [vmem:[%s428] sm:$0xf]
        %v1320 = vld [vmem:[%s428 + $0x4] sm:$0xf]
        %v1321 = vld [vmem:[%s428 + $0x8] sm:$0xf]
        %v1322 = vld [vmem:[%s428 + $0xc] sm:$0xf]
        %v1323 = vperm.slane %v522, 4
        %v1328 = vunpack.c.l.b16 %v1319
        %v1329 = vunpack.c.l.b16 %v1320
        %v1330 = vunpack.c.l.b16 %v1321
        %v1331 = vunpack.c.l.b16 %v1322
        %v1332 = vpack.c.b16 %v1329, %v1328
        %v1333 = vpack.c.b16 %v1331, %v1330
        %v1337 = vsel %vm541, %v1318, 0
        %1339 = vmatpush.bf16.msra.mxu0 0
        %1340 = vmatpush.bf16.msra.mxu0 0
        %1341 = vmatpush.bf16.msra.mxu0 0
        %1342 = vmatpush.bf16.msra.mxu0 0
        %1343 = vmatpush.bf16.msra.mxu0 0
        %1344 = vmatpush.bf16.msra.mxu0 0
        %1345 = vmatpush.bf16.msra.mxu0 %v1333
        %1346 = vmatpush.bf16.msra.mxu0 %v1332
        %1347 = vmatmul.bf16.gmra.mxu0 %v1337
        %v1348 = vpop.f32.mrf.mxu0
        %v1349 = vadd.f32 %v1323, %v1348
        %v1350 = vpop.f32.mrf.mxu0
        %v1351 = vadd.f32 %v1323, %v1350
        %1352 = vdwg.mxu0
        %v1353 = vmul.f32 %v1349, 0.5
        %v1354 = vmul.f32 %v1351, 0.5
        %v1355 = vmul.f32 %v1349, 0.044715
        %v1356 = vmul.f32 %v1351, 0.044715
        %v1357 = vmul.f32 %v1355, %v1349
        %v1358 = vmul.f32 %v1356, %v1351
        %v1359 = vmul.f32 %v1357, %v1349
        %v1360 = vmul.f32 %v1358, %v1351
        %v1361 = vadd.f32 %v1349, %v1359
        %v1362 = vadd.f32 %v1351, %v1360
        %v1363 = vmul.f32 %v1361, 0.7978846
        %v1364 = vmul.f32 %v1362, 0.7978846
        %v1365 = vtanh.pop %v1363
        %v1366 = vtanh.pop %v1364
        %v1367 = vadd.f32 %v1365, 1.0
        %v1368 = vadd.f32 %v1366, 1.0
        %v1369 = vmul.f32 %v1353, %v1367
        %v1370 = vmul.f32 %v1354, %v1368
        %v1371 = vpack.c.bf16 %v1370, %v1369
        %v1372 = vld [vmem:[%s433] sm:$0xf]
        %v1373 = vld [vmem:[%s433 + $0x4] sm:$0xf]
        %v1374 = vld [vmem:[%s433 + $0x8] sm:$0xf]
        %v1375 = vld [vmem:[%s433 + $0xc] sm:$0xf]
        %v1376 = vld [vmem:[%s433 + $0x10] sm:$0xf]
        %v1377 = vld [vmem:[%s433 + $0x14] sm:$0xf]
        %v1378 = vld [vmem:[%s433 + $0x18] sm:$0xf]
        %v1379 = vld [vmem:[%s433 + $0x1c] sm:$0xf]
        %v1380 = vperm.slane %v522, 5
        %v1389 = vunpack.c.l.b16 %v1372
        %v1390 = vunpack.c.l.b16 %v1373
        %v1391 = vunpack.c.l.b16 %v1374
        %v1392 = vunpack.c.l.b16 %v1375
        %v1393 = vunpack.c.l.b16 %v1376
        %v1394 = vunpack.c.l.b16 %v1377
        %v1395 = vunpack.c.l.b16 %v1378
        %v1396 = vunpack.c.l.b16 %v1379
        %v1397 = vpack.c.b16 %v1390, %v1389
        %v1398 = vpack.c.b16 %v1392, %v1391
        %v1399 = vpack.c.b16 %v1394, %v1393
        %v1400 = vpack.c.b16 %v1396, %v1395
        %vm1405 = vcmask 523264
        %v1407 = vsel %vm1405, %v1371, 0
        %1409 = vmatpush.bf16.msra.mxu0 0
        %1410 = vmatpush.bf16.msra.mxu0 0
        %1411 = vmatpush.bf16.msra.mxu0 0
        %1412 = vmatpush.bf16.msra.mxu0 0
        %1413 = vmatpush.bf16.msra.mxu0 %v1400
        %1414 = vmatpush.bf16.msra.mxu0 %v1399
        %1415 = vmatpush.bf16.msra.mxu0 %v1398
        %1416 = vmatpush.bf16.msra.mxu0 %v1397
        %1417 = vmatmul.bf16.gmra.mxu0 %v1407
        %v1418 = vpop.f32.mrf.mxu0
        %v1419 = vadd.f32 %v1380, %v1418
        %v1420 = vpop.f32.mrf.mxu0
        %v1421 = vadd.f32 %v1380, %v1420
        %1422 = vdwg.mxu0
        %v1423 = vadd.f32 %v1419, %v1316
        %v1424 = vadd.f32 %v1421, %v1317
        %v1425 = vsel %vm541, %v1423, 0.0
        %1426 = vadd.xlane.f32.xlu0 %v1425
        %v1427 = vpop.xlane.xlu0 %1426
        %v1428 = vsel %vm541, %v1424, 0.0
        %1429 = vadd.xlane.f32.xlu0 %v1428
        %v1430 = vpop.xlane.xlu0 %1429
        %v1431 = vmul.f32 %v1427, %v1273
        %v1432 = vmul.f32 %v1430, %v1273
        %v1433 = vsub.f32 %v1423, %v1431
        %v1434 = vsub.f32 %v1424, %v1432
        %v1435 = vmul.f32 %v1433, %v1433
        %v1436 = vmul.f32 %v1434, %v1434
        %v1437 = vsel %vm541, %v1435, 0.0
        %1438 = vadd.xlane.f32.xlu0 %v1437
        %v1439 = vpop.xlane.xlu0 %1438
        %v1440 = vsel %vm541, %v1436, 0.0
        %1441 = vadd.xlane.f32.xlu0 %v1440
        %v1442 = vpop.xlane.xlu0 %1441
        %v1443 = vmul.f32 %v1439, %v1273
        %v1444 = vmul.f32 %v1442, %v1273
        %v1445 = vadd.f32 %v1443, 1e-12
        %v1446 = vadd.f32 %v1444, 1e-12
        %v1447 = vrsqrt.pop %v1445
        %v1448 = vmul.f32 %v1447, %v1445
        %v1449 = vmul.f32 %v1448, %v1447
        %v1450 = vmul.f32 0.5, %v1449
        %v1451 = vsub.f32 1.5, %v1450
        %v1452 = vmul.f32 %v1447, %v1451
        %vm1453 = vweird.f32 %v1445
        %vm1454 = vweird.f32 %v1447
        %vm1455 = vmor %vm1453, %vm1454
        %v1456 = vsel %vm1455, %v1447, %v1452
        %v1457 = vrsqrt.pop %v1446
        %v1458 = vmul.f32 %v1457, %v1446
        %v1459 = vmul.f32 %v1458, %v1457
        %v1460 = vmul.f32 0.5, %v1459
        %v1461 = vsub.f32 1.5, %v1460
        %v1462 = vmul.f32 %v1457, %v1461
        %vm1463 = vweird.f32 %v1446
        %vm1464 = vweird.f32 %v1457
        %vm1465 = vmor %vm1463, %vm1464
        %v1466 = vsel %vm1465, %v1457, %v1462
        %v1467 = vmul.f32 %v1433, %v1456
        %v1468 = vmul.f32 %v1434, %v1466
        %v1469 = vperm.slane %v522, 6
        %v1470 = vmul.f32 %v1467, %v1469
        %v1471 = vmul.f32 %v1468, %v1469
        %v1472 = vperm.slane %v522, 7
        %v1473 = vadd.f32 %v1470, %v1472
        %v1474 = vadd.f32 %v1471, %v1472
        %1475 = vst.msk [vmem:[#allocation2] sm:$0xff] %vm541, %v1473
        %1476 = vst.msk [vmem:[#allocation2 + $0x8] sm:$0xff] %vm541, %v1474
        %1477 = vst.msk [vmem:[%s442] sm:$0xff] %vm541, %v1473
        %1478 = vst.msk [vmem:[%s442 + $0x8] sm:$0xff] %vm541, %v1474
        %p1479 = scmp.lt.s32.totalorder %s23, 1
        %s1480 = scalar_select %p1479, %s23, 1
        %s1481 = smul.addr %s1480, 2
        %s1482 = smul.addr %s1481, 8
        %s1483 = scalar_lea.vmem %s9, %s1482
        %p1484 = scmp.lt.s32.totalorder %s23, 1
        %s1485 = scalar_select %p1484, %s23, 1
        %s1486 = smul.addr %s1485, 8
        %s1487 = smul.addr %s1486, 8
        %s1488 = scalar_lea.vmem %s10, %s1487
        // Predicated region
        $region57: #{distil_bert_wrap_forward.1} parent=51 // pred_check
          %p1489 = pneg %p229
        $region58: #{distil_bert_wrap_forward.1} parent=51 // pred_check_branch
          %1491 = sbr.rel (%p1489) target = $region60
        $region59: #{distil_bert_wrap_forward.1} parent=51 // pred_region
          %1493 = vsyncadd [#allocation4], 0
          %s1494 = sshll.u32 [#allocation3], 4
          %s1495 = int_to_ptr.vmem [resolvable:$true] %s1494
          %s1496 = sshll.u32 %s8, 4
          %s1497 = int_to_ptr.hbm [resolvable:$true] %s1496
          %1502 = dma.vmem_to_hbm [thread:$0]  %s1495, 256, %s1497, [#allocation4], 128, 128, 8
        $region60: #{distil_bert_wrap_forward.1} parent=51 // pred_fallthru
          _
        // Predicated region
        $region61: #{distil_bert_wrap_forward.1} parent=51 // pred_check
          %p1503 = pneg %p255
        $region62: #{distil_bert_wrap_forward.1} parent=51 // pred_check_branch
          %1505 = sbr.rel (%p1503) target = $region64
        $region63: #{distil_bert_wrap_forward.1} parent=51 // pred_region
          _
        $region64: #{distil_bert_wrap_forward.1} parent=51 // pred_fallthru
          _
        // Predicated region
        $region65: #{distil_bert_wrap_forward.1} parent=51 // pred_check
          %p1506 = pneg %p281
        $region66: #{distil_bert_wrap_forward.1} parent=51 // pred_check_branch
          %1508 = sbr.rel (%p1506) target = $region68
        $region67: #{distil_bert_wrap_forward.1} parent=51 // pred_region
          _
        $region68: #{distil_bert_wrap_forward.1} parent=51 // pred_fallthru
          _
        // Predicated region
        $region69: #{distil_bert_wrap_forward.1} parent=51 // pred_check
          %p1509 = pneg %p229
        $region70: #{distil_bert_wrap_forward.1} parent=51 // pred_check_branch
          %1511 = sbr.rel (%p1509) target = $region72
        $region71: #{distil_bert_wrap_forward.1} parent=51 // pred_region
          %1513 = dma.done [#allocation4], 256
        $region72: #{distil_bert_wrap_forward.1} parent=51 // pred_fallthru
          _
      $region52: #{distil_bert_wrap_forward.1} parent=5 // pred_fallthru
        _
      %p1514 = scmp.le.s32.totalorder 2, %s18
      // Predicated region
      $region73: #{distil_bert_wrap_forward.1} parent=5 // pred_check
        %p1515 = pneg %p1514
      $region74: #{distil_bert_wrap_forward.1} parent=5 // pred_check_branch
        %1517 = sbr.rel (%p1515) target = $region76
      $region75: #{distil_bert_wrap_forward.1} parent=5 // pred_region
        %s1518 = ssub.s32 %s18, 2
        // Predicated region
        $region77: #{distil_bert_wrap_forward.1} parent=75 // pred_check
          %p1519 = pneg %p261
        $region78: #{distil_bert_wrap_forward.1} parent=75 // pred_check_branch
          %1521 = sbr.rel (%p1519) target = $region80
        $region79: #{distil_bert_wrap_forward.1} parent=75 // pred_region
          %p1522 = scmp.lt.s32.totalorder %s24, 1
          %s1523 = scalar_select %p1522, %s24, 1
          %s1524 = smul.addr %s1523, 2
          %s1525 = smul.addr %s1524, 8
          %s1526 = scalar_lea.vmem %s9, %s1525
        $region80: #{distil_bert_wrap_forward.1} parent=75 // pred_fallthru
          _
        // Predicated region
        $region81: #{distil_bert_wrap_forward.1} parent=75 // pred_check
          %p1527 = pneg %p287
        $region82: #{distil_bert_wrap_forward.1} parent=75 // pred_check_branch
          %1529 = sbr.rel (%p1527) target = $region84
        $region83: #{distil_bert_wrap_forward.1} parent=75 // pred_region
          %p1530 = scmp.lt.s32.totalorder %s24, 1
          %s1531 = scalar_select %p1530, %s24, 1
          %s1532 = smul.addr %s1531, 8
          %s1533 = smul.addr %s1532, 8
          %s1534 = scalar_lea.vmem %s10, %s1533
        $region84: #{distil_bert_wrap_forward.1} parent=75 // pred_fallthru
          _
      $region76: #{distil_bert_wrap_forward.1} parent=5 // pred_fallthru
        _
    $region6: #{distil_bert_wrap_forward.1} parent=1 // loop_footer
      %s22 = sadd.s32 1, %s18
    $region7: #{distil_bert_wrap_forward.1} parent=1 // loop_footer_branch
      %17 = sbr.rel target = $region3
    $region8: #{distil_bert_wrap_forward.1} parent=1 // loop_exit
      _
    %1535 = vsyncpa [#allocation4], 1
    %s1536 = scalar_lea.sflag [#allocation4], 1
    %1537 = vsyncpa %s1536, 1

</llo_original>
